<compile_context>
chip_gen: v6e
topology: v6e:2x2x1
jax: 0.10.0
libtpu: 0.0.40
codegen_flags: <defaults>
</compile_context>

<pallas_src>
import functools

import jax
import jax.numpy as jnp
from jax import lax
from jax.experimental import pallas as pl
from jax.experimental.pallas import tpu as pltpu

EPS = 1e-9


def _tps_grid_kernel(xc_ref, wf_ref, af_ref, lat_ref, perm_ref, out_ref, *, k, bt):
    """Hot path for a block of `bt` batch elements.

    xc_ref  : (n_pad*3k,) SMEM  [b*3k + 3kk + {0,1,2}] = (-2*X[b,kk,0], -2*X[b,kk,1], |X[b,kk]|^2)
    wf_ref  : (n_pad*2k,) SMEM  [b*2k + 2kk + c]       = W[b, kk, c]
    af_ref  : (n_pad*6,)  SMEM  [b*6  + 2j  + c]       = A[b, j,  c]
    lat_ref : (3, SL, 128) VMEM  [gx, gy, gx^2+gy^2] for flat lattice point p = s*128 + lane
    perm_ref: (256, 256)   VMEM  0/1 lane-interleave permutation (x/y -> channel-minor order)
    out_ref : (bt, SL, 256) VMEM output tile; per batch, flat element 2p+c = channel c of point p
    """
    gx = lat_ref[0]                      # (SL, 128)
    gy = lat_ref[1]
    r2 = lat_ref[2]
    base = pl.program_id(0) * bt

    def body(b, carry):
        bb = base + b
        aoff = bb * 6
        xoff = bb * (3 * k)
        woff = bb * (2 * k)

        # affine part: out[c] = A[0,c] + A[1,c]*gx + A[2,c]*gy   (pure VPU FMAs)
        acc_x = af_ref[aoff + 0] + af_ref[aoff + 2] * gx + af_ref[aoff + 4] * gy
        acc_y = af_ref[aoff + 1] + af_ref[aoff + 3] * gx + af_ref[aoff + 5] * gy

        # RBF part with the expanded square (scalars precomputed in the wrapper):
        #   d2 = r2 - 2x*gx - 2y*gy + |X_k|^2 ;  u = d2 * log(d2)   (EUP log)
        for kk in range(k):              # k is small -> static unroll
            d2 = ((r2 + xc_ref[xoff + 3 * kk + 2])
                  + xc_ref[xoff + 3 * kk + 0] * gx
                  + xc_ref[xoff + 3 * kk + 1] * gy)
            d2 = jnp.maximum(d2, EPS)    # guards log() against cancellation-negative d2
            u = d2 * jnp.log(d2)
            acc_x = acc_x + wf_ref[woff + 2 * kk + 0] * u
            acc_y = acc_y + wf_ref[woff + 2 * kk + 1] * u

        # Interleave x/y along lanes on the (idle) MXU so the HBM layout is already
        # channel-minor: out[s, 2q+c] = (acc_x if c==0 else acc_y)[s, q].
        z = jnp.concatenate([acc_x, acc_y], axis=-1)              # (SL, 256)
        out_ref[b] = jnp.dot(z, perm_ref[...],
                             preferred_element_type=jnp.float32,
                             precision=lax.Precision.HIGHEST)
        return carry

    lax.fori_loop(0, bt, body, 0)


def _pick_block_batch(n, hw_pad, requested):
    """Batch block size: big enough to amortize per-step overhead, small enough to
    (a) keep the double-buffered out block <= ~8 MiB (v7x 64 MiB VMEM safe) and
    (b) leave >= 2 grid steps so v7x megacore can shard the batch."""
    bytes_per_row = hw_pad * 2 * 4
    vmem_budget = 8 * 1024 * 1024
    bt_cap = max(1, vmem_budget // (2 * bytes_per_row))
    bt = max(1, min(requested, n, bt_cap))
    if n >= 2:
        bt = min(bt, -(-n // 2))
    return bt


def tps_forward(X, Y, w, h, block_batch=64):
    """X: (n, k, 2) control pts, Y: (1, k, 2) targets (torch code requires batch-1 Y),
    w/h: output grid size. Returns (n, h, w, 2) float32."""
    X = X.astype(jnp.float32)
    Y = Y.astype(jnp.float32)
    n, k = X.shape[:2]
    hw = h * w

    # ---- solve for W, A (small (k+3)x(k+3) batched system, plain JAX glue) ----
    # TODO(synk): torch.solve has no Pallas equivalent; kept as jnp.linalg.solve.
    D2 = jnp.sum((X[:, :, None, :] - X[:, None, :, :]) ** 2, axis=-1)   # (n,k,k)
    Kmat = D2 * jnp.log(D2 + EPS)
    P = jnp.concatenate([jnp.ones((n, k, 1), jnp.float32), X], axis=-1)  # (n,k,3)
    Z = jnp.zeros((1, k + 3, 2), jnp.float32).at[:, :k, :].set(Y)
    L = jnp.zeros((n, k + 3, k + 3), jnp.float32)
    L = L.at[:, :k, :k].set(Kmat)
    L = L.at[:, :k, k:].set(P)
    L = L.at[:, k:, :k].set(jnp.transpose(P, (0, 2, 1)))
    Q = jnp.linalg.solve(L, jnp.broadcast_to(Z, (n, k + 3, 2)))
    Wc, Ac = Q[:, :k], Q[:, k:]                     # (n, k, 2), (n, 3, 2)

    # ---- pack tiny per-batch scalars (expanded-square coefficients) ----
    Xc = jnp.concatenate([-2.0 * X, jnp.sum(X * X, axis=-1, keepdims=True)],
                         axis=-1).reshape(n, 3 * k)   # [-2x, -2y, |x|^2] per control point
    Wf = Wc.reshape(n, 2 * k)
    Af = Ac.reshape(n, 6)

    # ---- lane-dense flattened lattice (computed once, tiny constant input) ----
    sl = pl.cdiv(hw, 128)
    hw_pad = sl * 128
    pi = jnp.arange(hw_pad, dtype=jnp.int32)
    col = (pi % w).astype(jnp.float32)
    row = (pi // w).astype(jnp.float32)
    gx = col * (2.0 / max(w - 1, 1)) - 1.0           # torch.linspace(-1, 1, w)
    gy = row * (2.0 / max(h - 1, 1)) - 1.0           # torch.linspace(-1, 1, h)
    r2 = gx * gx + gy * gy
    lat = jnp.stack([gx, gy, r2]).reshape(3, sl, 128)

    # ---- 0/1 lane-interleave permutation: out col j takes input col (j%2)*128 + j//2 ----
    j = jnp.arange(256)
    src = (j % 2) * 128 + j // 2
    perm = (jnp.arange(256)[:, None] == src[None, :]).astype(jnp.float32)   # (256, 256)

    # ---- batch blocking ----
    bt = _pick_block_batch(n, hw_pad, block_batch)
    n_pad = pl.cdiv(n, bt) * bt
    if n_pad != n:
        pad = ((0, n_pad - n), (0, 0))
        Xc = jnp.pad(Xc, pad)
        Wf = jnp.pad(Wf, pad)
        Af = jnp.pad(Af, pad)
    xc1 = Xc.reshape(-1)
    wf1 = Wf.reshape(-1)
    af1 = Af.reshape(-1)

    kernel = functools.partial(_tps_grid_kernel, k=k, bt=bt)
    out = pl.pallas_call(
        kernel,
        out_shape=jax.ShapeDtypeStruct((n_pad, sl, 256), jnp.float32),
        grid_spec=pltpu.PrefetchScalarGridSpec(
            num_scalar_prefetch=0,
            grid=(n_pad // bt,),
            in_specs=[
                pl.BlockSpec(memory_space=pltpu.MemorySpace.SMEM),   # Xc flat
                pl.BlockSpec(memory_space=pltpu.MemorySpace.SMEM),   # Wf flat
                pl.BlockSpec(memory_space=pltpu.MemorySpace.SMEM),   # Af flat
                pl.BlockSpec((3, sl, 128), lambda i: (0, 0, 0)),     # lattice (constant)
                pl.BlockSpec((256, 256), lambda i: (0, 0)),          # interleave perm (constant)
            ],
            out_specs=pl.BlockSpec((bt, sl, 256), lambda i: (i, 0, 0)),
        ),
        compiler_params=pltpu.CompilerParams(
            dimension_semantics=("parallel",)),
    )(xc1, wf1, af1, lat, perm)

    # Kernel already wrote channel-minor order; this is a free reshape when
    # hw % 128 == 0 and n % bt == 0 (no extra HBM pass).
    out = out.reshape(n_pad, hw_pad * 2)
    if n_pad != n or hw_pad != hw:
        out = out[:n, : 2 * hw]
    return out.reshape(n, h, w, 2)


def tps_reference(X, Y, w, h):
    """Pure-JAX mirror of the torch forward, for validation."""
    X = X.astype(jnp.float32)
    Y = Y.astype(jnp.float32)
    n, k = X.shape[:2]
    xs = jnp.linspace(-1.0, 1.0, w, dtype=jnp.float32)
    ys = jnp.linspace(-1.0, 1.0, h, dtype=jnp.float32)
    grid = jnp.stack([jnp.broadcast_to(xs[None, :], (h, w)),
                      jnp.broadcast_to(ys[:, None], (h, w))], axis=-1)
    grid = grid.reshape(1, h * w, 2)

    D2 = jnp.sum((X[:, :, None, :] - X[:, None, :, :]) ** 2, axis=-1)
    Kmat = D2 * jnp.log(D2 + EPS)
    P = jnp.concatenate([jnp.ones((n, k, 1), jnp.float32), X], axis=-1)
    Z = jnp.zeros((1, k + 3, 2), jnp.float32).at[:, :k, :].set(Y)
    L = jnp.zeros((n, k + 3, k + 3), jnp.float32)
    L = L.at[:, :k, :k].set(Kmat)
    L = L.at[:, :k, k:].set(P)
    L = L.at[:, k:, :k].set(jnp.transpose(P, (0, 2, 1)))
    Q = jnp.linalg.solve(L, jnp.broadcast_to(Z, (n, k + 3, 2)))
    Wc, Ac = Q[:, :k], Q[:, k:]

    D2g = jnp.sum((grid[:, :, None, :] - X[:, None, :, :]) ** 2, axis=-1)
    U = D2g * jnp.log(D2g + EPS)
    Pg = jnp.concatenate([jnp.ones((1, h * w, 1), jnp.float32), grid], axis=-1)
    hi = jax.lax.Precision.HIGHEST
    out = (jnp.matmul(Pg, Ac, precision=hi) + jnp.matmul(U, Wc, precision=hi))
    return out.reshape(-1, h, w, 2)


if __name__ == "__main__":
    n, k, h, w = 2, 8, 16, 16
    key = jax.random.PRNGKey(0)
    kx, ky = jax.random.split(key)
    # control points and target points in [-0.95, 0.95]^2
    X = jax.random.uniform(kx, (n, k, 2), jnp.float32, -0.95, 0.95)
    Y = jax.random.uniform(ky, (1, k, 2), jnp.float32, -0.95, 0.95)

    out = tps_forward(X, Y, w, h)
    out = jax.block_until_ready(out)

    ref = tps_reference(X, Y, w, h)
    assert out.shape == (n, h, w, 2), out.shape
    err = float(jnp.max(jnp.abs(out - ref)))
    assert jnp.allclose(out, ref, rtol=2e-4, atol=2e-4), err
    print("KERNEL_OK")
</pallas_src>

<mosaic_0001>
module attributes {stable_mosaic.version = 11 : i64} {
  func.func @_tps_grid_kernel(%arg0: i32, %arg1: memref<48xf32, #tpu.memory_space<smem>>, %arg2: memref<32xf32, #tpu.memory_space<smem>>, %arg3: memref<12xf32, #tpu.memory_space<smem>>, %arg4: memref<3x2x128xf32, #tpu.memory_space<vmem>>, %arg5: memref<256x256xf32, #tpu.memory_space<vmem>>, %arg6: memref<1x2x256xf32, #tpu.memory_space<vmem>>) attributes {dimension_semantics = [#tpu.dimension_semantics<parallel>], iteration_bounds = array<i64: 2>, scalar_prefetch = 0 : i64, scratch_operands = 0 : i64, tpu.core_type = #tpu.core_type<tc>, window_params = [{transform_indices = @transform_0, window_bounds = array<i64: 48>}, {transform_indices = @transform_1, window_bounds = array<i64: 32>}, {transform_indices = @transform_2, window_bounds = array<i64: 12>}, {pipeline_mode = #tpu.pipeline_mode<synchronous>, transform_indices = @transform_3, window_bounds = array<i64: 3, 2, 128>}, {pipeline_mode = #tpu.pipeline_mode<synchronous>, transform_indices = @transform_4, window_bounds = array<i64: 256, 256>}, {transform_indices = @transform_5, window_bounds = array<i64: 1, 2, 256>}]} {
    %c0 = arith.constant 0 : index
    %c0_0 = arith.constant 0 : index
    %c0_1 = arith.constant 0 : index
    %0 = vector.load %arg4[%c0, %c0_0, %c0_1] : memref<3x2x128xf32, #tpu.memory_space<vmem>>, vector<1x2x128xf32>
    %1 = vector.shape_cast %0 : vector<1x2x128xf32> to vector<2x128xf32>
    %c1 = arith.constant 1 : index
    %c0_2 = arith.constant 0 : index
    %c0_3 = arith.constant 0 : index
    %2 = vector.load %arg4[%c1, %c0_2, %c0_3] : memref<3x2x128xf32, #tpu.memory_space<vmem>>, vector<1x2x128xf32>
    %3 = vector.shape_cast %2 : vector<1x2x128xf32> to vector<2x128xf32>
    %c2 = arith.constant 2 : index
    %c0_4 = arith.constant 0 : index
    %c0_5 = arith.constant 0 : index
    %4 = vector.load %arg4[%c2, %c0_4, %c0_5] : memref<3x2x128xf32, #tpu.memory_space<vmem>>, vector<1x2x128xf32>
    %5 = vector.shape_cast %4 : vector<1x2x128xf32> to vector<2x128xf32>
    %c1_i32 = arith.constant 1 : i32
    %6 = arith.muli %arg0, %c1_i32 : i32
    %c0_i32 = arith.constant 0 : i32
    %7 = arith.addi %6, %c0_i32 : i32
    %c6_i32 = arith.constant 6 : i32
    %8 = arith.muli %7, %c6_i32 : i32
    %c24_i32 = arith.constant 24 : i32
    %9 = arith.muli %7, %c24_i32 : i32
    %c16_i32 = arith.constant 16 : i32
    %10 = arith.muli %7, %c16_i32 : i32
    %c0_i32_6 = arith.constant 0 : i32
    %11 = arith.addi %8, %c0_i32_6 : i32
    %12 = arith.index_cast %11 : i32 to index
    %13 = memref.load %arg3[%12] : memref<12xf32, #tpu.memory_space<smem>>
    %c2_i32 = arith.constant 2 : i32
    %14 = arith.addi %8, %c2_i32 : i32
    %15 = arith.index_cast %14 : i32 to index
    %16 = memref.load %arg3[%15] : memref<12xf32, #tpu.memory_space<smem>>
    %17 = vector.broadcast %16 : f32 to vector<2x128xf32>
    %18 = arith.mulf %17, %1 : vector<2x128xf32>
    %19 = vector.broadcast %13 : f32 to vector<2x128xf32>
    %20 = arith.addf %19, %18 : vector<2x128xf32>
    %c4_i32 = arith.constant 4 : i32
    %21 = arith.addi %8, %c4_i32 : i32
    %22 = arith.index_cast %21 : i32 to index
    %23 = memref.load %arg3[%22] : memref<12xf32, #tpu.memory_space<smem>>
    %24 = vector.broadcast %23 : f32 to vector<2x128xf32>
    %25 = arith.mulf %24, %3 : vector<2x128xf32>
    %26 = arith.addf %20, %25 : vector<2x128xf32>
    %c1_i32_7 = arith.constant 1 : i32
    %27 = arith.addi %8, %c1_i32_7 : i32
    %28 = arith.index_cast %27 : i32 to index
    %29 = memref.load %arg3[%28] : memref<12xf32, #tpu.memory_space<smem>>
    %c3_i32 = arith.constant 3 : i32
    %30 = arith.addi %8, %c3_i32 : i32
    %31 = arith.index_cast %30 : i32 to index
    %32 = memref.load %arg3[%31] : memref<12xf32, #tpu.memory_space<smem>>
    %33 = vector.broadcast %32 : f32 to vector<2x128xf32>
    %34 = arith.mulf %33, %1 : vector<2x128xf32>
    %35 = vector.broadcast %29 : f32 to vector<2x128xf32>
    %36 = arith.addf %35, %34 : vector<2x128xf32>
    %c5_i32 = arith.constant 5 : i32
    %37 = arith.addi %8, %c5_i32 : i32
    %38 = arith.index_cast %37 : i32 to index
    %39 = memref.load %arg3[%38] : memref<12xf32, #tpu.memory_space<smem>>
    %40 = vector.broadcast %39 : f32 to vector<2x128xf32>
    %41 = arith.mulf %40, %3 : vector<2x128xf32>
    %42 = arith.addf %36, %41 : vector<2x128xf32>
    %c0_i32_8 = arith.constant 0 : i32
    %43 = arith.addi %9, %c0_i32_8 : i32
    %c2_i32_9 = arith.constant 2 : i32
    %44 = arith.addi %43, %c2_i32_9 : i32
    %45 = arith.index_cast %44 : i32 to index
    %46 = memref.load %arg1[%45] : memref<48xf32, #tpu.memory_space<smem>>
    %47 = vector.broadcast %46 : f32 to vector<2x128xf32>
    %48 = arith.addf %5, %47 : vector<2x128xf32>
    %c0_i32_10 = arith.constant 0 : i32
    %49 = arith.addi %9, %c0_i32_10 : i32
    %c0_i32_11 = arith.constant 0 : i32
    %50 = arith.addi %49, %c0_i32_11 : i32
    %51 = arith.index_cast %50 : i32 to index
    %52 = memref.load %arg1[%51] : memref<48xf32, #tpu.memory_space<smem>>
    %53 = vector.broadcast %52 : f32 to vector<2x128xf32>
    %54 = arith.mulf %53, %1 : vector<2x128xf32>
    %55 = arith.addf %48, %54 : vector<2x128xf32>
    %c0_i32_12 = arith.constant 0 : i32
    %56 = arith.addi %9, %c0_i32_12 : i32
    %c1_i32_13 = arith.constant 1 : i32
    %57 = arith.addi %56, %c1_i32_13 : i32
    %58 = arith.index_cast %57 : i32 to index
    %59 = memref.load %arg1[%58] : memref<48xf32, #tpu.memory_space<smem>>
    %60 = vector.broadcast %59 : f32 to vector<2x128xf32>
    %61 = arith.mulf %60, %3 : vector<2x128xf32>
    %62 = arith.addf %55, %61 : vector<2x128xf32>
    %cst = arith.constant 9.99999971E-10 : f32
    %63 = vector.broadcast %cst : f32 to vector<2x128xf32>
    %64 = arith.maximumf %62, %63 : vector<2x128xf32>
    %65 = math.log %64 : vector<2x128xf32>
    %66 = arith.mulf %64, %65 : vector<2x128xf32>
    %c0_i32_14 = arith.constant 0 : i32
    %67 = arith.addi %10, %c0_i32_14 : i32
    %c0_i32_15 = arith.constant 0 : i32
    %68 = arith.addi %67, %c0_i32_15 : i32
    %69 = arith.index_cast %68 : i32 to index
    %70 = memref.load %arg2[%69] : memref<32xf32, #tpu.memory_space<smem>>
    %71 = vector.broadcast %70 : f32 to vector<2x128xf32>
    %72 = arith.mulf %71, %66 : vector<2x128xf32>
    %73 = arith.addf %26, %72 : vector<2x128xf32>
    %c0_i32_16 = arith.constant 0 : i32
    %74 = arith.addi %10, %c0_i32_16 : i32
    %c1_i32_17 = arith.constant 1 : i32
    %75 = arith.addi %74, %c1_i32_17 : i32
    %76 = arith.index_cast %75 : i32 to index
    %77 = memref.load %arg2[%76] : memref<32xf32, #tpu.memory_space<smem>>
    %78 = vector.broadcast %77 : f32 to vector<2x128xf32>
    %79 = arith.mulf %78, %66 : vector<2x128xf32>
    %80 = arith.addf %42, %79 : vector<2x128xf32>
    %c3_i32_18 = arith.constant 3 : i32
    %81 = arith.addi %9, %c3_i32_18 : i32
    %c2_i32_19 = arith.constant 2 : i32
    %82 = arith.addi %81, %c2_i32_19 : i32
    %83 = arith.index_cast %82 : i32 to index
    %84 = memref.load %arg1[%83] : memref<48xf32, #tpu.memory_space<smem>>
    %85 = vector.broadcast %84 : f32 to vector<2x128xf32>
    %86 = arith.addf %5, %85 : vector<2x128xf32>
    %c3_i32_20 = arith.constant 3 : i32
    %87 = arith.addi %9, %c3_i32_20 : i32
    %c0_i32_21 = arith.constant 0 : i32
    %88 = arith.addi %87, %c0_i32_21 : i32
    %89 = arith.index_cast %88 : i32 to index
    %90 = memref.load %arg1[%89] : memref<48xf32, #tpu.memory_space<smem>>
    %91 = vector.broadcast %90 : f32 to vector<2x128xf32>
    %92 = arith.mulf %91, %1 : vector<2x128xf32>
    %93 = arith.addf %86, %92 : vector<2x128xf32>
    %c3_i32_22 = arith.constant 3 : i32
    %94 = arith.addi %9, %c3_i32_22 : i32
    %c1_i32_23 = arith.constant 1 : i32
    %95 = arith.addi %94, %c1_i32_23 : i32
    %96 = arith.index_cast %95 : i32 to index
    %97 = memref.load %arg1[%96] : memref<48xf32, #tpu.memory_space<smem>>
    %98 = vector.broadcast %97 : f32 to vector<2x128xf32>
    %99 = arith.mulf %98, %3 : vector<2x128xf32>
    %100 = arith.addf %93, %99 : vector<2x128xf32>
    %cst_24 = arith.constant 9.99999971E-10 : f32
    %101 = vector.broadcast %cst_24 : f32 to vector<2x128xf32>
    %102 = arith.maximumf %100, %101 : vector<2x128xf32>
    %103 = math.log %102 : vector<2x128xf32>
    %104 = arith.mulf %102, %103 : vector<2x128xf32>
    %c2_i32_25 = arith.constant 2 : i32
    %105 = arith.addi %10, %c2_i32_25 : i32
    %c0_i32_26 = arith.constant 0 : i32
    %106 = arith.addi %105, %c0_i32_26 : i32
    %107 = arith.index_cast %106 : i32 to index
    %108 = memref.load %arg2[%107] : memref<32xf32, #tpu.memory_space<smem>>
    %109 = vector.broadcast %108 : f32 to vector<2x128xf32>
    %110 = arith.mulf %109, %104 : vector<2x128xf32>
    %111 = arith.addf %73, %110 : vector<2x128xf32>
    %c2_i32_27 = arith.constant 2 : i32
    %112 = arith.addi %10, %c2_i32_27 : i32
    %c1_i32_28 = arith.constant 1 : i32
    %113 = arith.addi %112, %c1_i32_28 : i32
    %114 = arith.index_cast %113 : i32 to index
    %115 = memref.load %arg2[%114] : memref<32xf32, #tpu.memory_space<smem>>
    %116 = vector.broadcast %115 : f32 to vector<2x128xf32>
    %117 = arith.mulf %116, %104 : vector<2x128xf32>
    %118 = arith.addf %80, %117 : vector<2x128xf32>
    %c6_i32_29 = arith.constant 6 : i32
    %119 = arith.addi %9, %c6_i32_29 : i32
    %c2_i32_30 = arith.constant 2 : i32
    %120 = arith.addi %119, %c2_i32_30 : i32
    %121 = arith.index_cast %120 : i32 to index
    %122 = memref.load %arg1[%121] : memref<48xf32, #tpu.memory_space<smem>>
    %123 = vector.broadcast %122 : f32 to vector<2x128xf32>
    %124 = arith.addf %5, %123 : vector<2x128xf32>
    %c6_i32_31 = arith.constant 6 : i32
    %125 = arith.addi %9, %c6_i32_31 : i32
    %c0_i32_32 = arith.constant 0 : i32
    %126 = arith.addi %125, %c0_i32_32 : i32
    %127 = arith.index_cast %126 : i32 to index
    %128 = memref.load %arg1[%127] : memref<48xf32, #tpu.memory_space<smem>>
    %129 = vector.broadcast %128 : f32 to vector<2x128xf32>
    %130 = arith.mulf %129, %1 : vector<2x128xf32>
    %131 = arith.addf %124, %130 : vector<2x128xf32>
    %c6_i32_33 = arith.constant 6 : i32
    %132 = arith.addi %9, %c6_i32_33 : i32
    %c1_i32_34 = arith.constant 1 : i32
    %133 = arith.addi %132, %c1_i32_34 : i32
    %134 = arith.index_cast %133 : i32 to index
    %135 = memref.load %arg1[%134] : memref<48xf32, #tpu.memory_space<smem>>
    %136 = vector.broadcast %135 : f32 to vector<2x128xf32>
    %137 = arith.mulf %136, %3 : vector<2x128xf32>
    %138 = arith.addf %131, %137 : vector<2x128xf32>
    %cst_35 = arith.constant 9.99999971E-10 : f32
    %139 = vector.broadcast %cst_35 : f32 to vector<2x128xf32>
    %140 = arith.maximumf %138, %139 : vector<2x128xf32>
    %141 = math.log %140 : vector<2x128xf32>
    %142 = arith.mulf %140, %141 : vector<2x128xf32>
    %c4_i32_36 = arith.constant 4 : i32
    %143 = arith.addi %10, %c4_i32_36 : i32
    %c0_i32_37 = arith.constant 0 : i32
    %144 = arith.addi %143, %c0_i32_37 : i32
    %145 = arith.index_cast %144 : i32 to index
    %146 = memref.load %arg2[%145] : memref<32xf32, #tpu.memory_space<smem>>
    %147 = vector.broadcast %146 : f32 to vector<2x128xf32>
    %148 = arith.mulf %147, %142 : vector<2x128xf32>
    %149 = arith.addf %111, %148 : vector<2x128xf32>
    %c4_i32_38 = arith.constant 4 : i32
    %150 = arith.addi %10, %c4_i32_38 : i32
    %c1_i32_39 = arith.constant 1 : i32
    %151 = arith.addi %150, %c1_i32_39 : i32
    %152 = arith.index_cast %151 : i32 to index
    %153 = memref.load %arg2[%152] : memref<32xf32, #tpu.memory_space<smem>>
    %154 = vector.broadcast %153 : f32 to vector<2x128xf32>
    %155 = arith.mulf %154, %142 : vector<2x128xf32>
    %156 = arith.addf %118, %155 : vector<2x128xf32>
    %c9_i32 = arith.constant 9 : i32
    %157 = arith.addi %9, %c9_i32 : i32
    %c2_i32_40 = arith.constant 2 : i32
    %158 = arith.addi %157, %c2_i32_40 : i32
    %159 = arith.index_cast %158 : i32 to index
    %160 = memref.load %arg1[%159] : memref<48xf32, #tpu.memory_space<smem>>
    %161 = vector.broadcast %160 : f32 to vector<2x128xf32>
    %162 = arith.addf %5, %161 : vector<2x128xf32>
    %c9_i32_41 = arith.constant 9 : i32
    %163 = arith.addi %9, %c9_i32_41 : i32
    %c0_i32_42 = arith.constant 0 : i32
    %164 = arith.addi %163, %c0_i32_42 : i32
    %165 = arith.index_cast %164 : i32 to index
    %166 = memref.load %arg1[%165] : memref<48xf32, #tpu.memory_space<smem>>
    %167 = vector.broadcast %166 : f32 to vector<2x128xf32>
    %168 = arith.mulf %167, %1 : vector<2x128xf32>
    %169 = arith.addf %162, %168 : vector<2x128xf32>
    %c9_i32_43 = arith.constant 9 : i32
    %170 = arith.addi %9, %c9_i32_43 : i32
    %c1_i32_44 = arith.constant 1 : i32
    %171 = arith.addi %170, %c1_i32_44 : i32
    %172 = arith.index_cast %171 : i32 to index
    %173 = memref.load %arg1[%172] : memref<48xf32, #tpu.memory_space<smem>>
    %174 = vector.broadcast %173 : f32 to vector<2x128xf32>
    %175 = arith.mulf %174, %3 : vector<2x128xf32>
    %176 = arith.addf %169, %175 : vector<2x128xf32>
    %cst_45 = arith.constant 9.99999971E-10 : f32
    %177 = vector.broadcast %cst_45 : f32 to vector<2x128xf32>
    %178 = arith.maximumf %176, %177 : vector<2x128xf32>
    %179 = math.log %178 : vector<2x128xf32>
    %180 = arith.mulf %178, %179 : vector<2x128xf32>
    %c6_i32_46 = arith.constant 6 : i32
    %181 = arith.addi %10, %c6_i32_46 : i32
    %c0_i32_47 = arith.constant 0 : i32
    %182 = arith.addi %181, %c0_i32_47 : i32
    %183 = arith.index_cast %182 : i32 to index
    %184 = memref.load %arg2[%183] : memref<32xf32, #tpu.memory_space<smem>>
    %185 = vector.broadcast %184 : f32 to vector<2x128xf32>
    %186 = arith.mulf %185, %180 : vector<2x128xf32>
    %187 = arith.addf %149, %186 : vector<2x128xf32>
    %c6_i32_48 = arith.constant 6 : i32
    %188 = arith.addi %10, %c6_i32_48 : i32
    %c1_i32_49 = arith.constant 1 : i32
    %189 = arith.addi %188, %c1_i32_49 : i32
    %190 = arith.index_cast %189 : i32 to index
    %191 = memref.load %arg2[%190] : memref<32xf32, #tpu.memory_space<smem>>
    %192 = vector.broadcast %191 : f32 to vector<2x128xf32>
    %193 = arith.mulf %192, %180 : vector<2x128xf32>
    %194 = arith.addf %156, %193 : vector<2x128xf32>
    %c12_i32 = arith.constant 12 : i32
    %195 = arith.addi %9, %c12_i32 : i32
    %c2_i32_50 = arith.constant 2 : i32
    %196 = arith.addi %195, %c2_i32_50 : i32
    %197 = arith.index_cast %196 : i32 to index
    %198 = memref.load %arg1[%197] : memref<48xf32, #tpu.memory_space<smem>>
    %199 = vector.broadcast %198 : f32 to vector<2x128xf32>
    %200 = arith.addf %5, %199 : vector<2x128xf32>
    %c12_i32_51 = arith.constant 12 : i32
    %201 = arith.addi %9, %c12_i32_51 : i32
    %c0_i32_52 = arith.constant 0 : i32
    %202 = arith.addi %201, %c0_i32_52 : i32
    %203 = arith.index_cast %202 : i32 to index
    %204 = memref.load %arg1[%203] : memref<48xf32, #tpu.memory_space<smem>>
    %205 = vector.broadcast %204 : f32 to vector<2x128xf32>
    %206 = arith.mulf %205, %1 : vector<2x128xf32>
    %207 = arith.addf %200, %206 : vector<2x128xf32>
    %c12_i32_53 = arith.constant 12 : i32
    %208 = arith.addi %9, %c12_i32_53 : i32
    %c1_i32_54 = arith.constant 1 : i32
    %209 = arith.addi %208, %c1_i32_54 : i32
    %210 = arith.index_cast %209 : i32 to index
    %211 = memref.load %arg1[%210] : memref<48xf32, #tpu.memory_space<smem>>
    %212 = vector.broadcast %211 : f32 to vector<2x128xf32>
    %213 = arith.mulf %212, %3 : vector<2x128xf32>
    %214 = arith.addf %207, %213 : vector<2x128xf32>
    %cst_55 = arith.constant 9.99999971E-10 : f32
    %215 = vector.broadcast %cst_55 : f32 to vector<2x128xf32>
    %216 = arith.maximumf %214, %215 : vector<2x128xf32>
    %217 = math.log %216 : vector<2x128xf32>
    %218 = arith.mulf %216, %217 : vector<2x128xf32>
    %c8_i32 = arith.constant 8 : i32
    %219 = arith.addi %10, %c8_i32 : i32
    %c0_i32_56 = arith.constant 0 : i32
    %220 = arith.addi %219, %c0_i32_56 : i32
    %221 = arith.index_cast %220 : i32 to index
    %222 = memref.load %arg2[%221] : memref<32xf32, #tpu.memory_space<smem>>
    %223 = vector.broadcast %222 : f32 to vector<2x128xf32>
    %224 = arith.mulf %223, %218 : vector<2x128xf32>
    %225 = arith.addf %187, %224 : vector<2x128xf32>
    %c8_i32_57 = arith.constant 8 : i32
    %226 = arith.addi %10, %c8_i32_57 : i32
    %c1_i32_58 = arith.constant 1 : i32
    %227 = arith.addi %226, %c1_i32_58 : i32
    %228 = arith.index_cast %227 : i32 to index
    %229 = memref.load %arg2[%228] : memref<32xf32, #tpu.memory_space<smem>>
    %230 = vector.broadcast %229 : f32 to vector<2x128xf32>
    %231 = arith.mulf %230, %218 : vector<2x128xf32>
    %232 = arith.addf %194, %231 : vector<2x128xf32>
    %c15_i32 = arith.constant 15 : i32
    %233 = arith.addi %9, %c15_i32 : i32
    %c2_i32_59 = arith.constant 2 : i32
    %234 = arith.addi %233, %c2_i32_59 : i32
    %235 = arith.index_cast %234 : i32 to index
    %236 = memref.load %arg1[%235] : memref<48xf32, #tpu.memory_space<smem>>
    %237 = vector.broadcast %236 : f32 to vector<2x128xf32>
    %238 = arith.addf %5, %237 : vector<2x128xf32>
    %c15_i32_60 = arith.constant 15 : i32
    %239 = arith.addi %9, %c15_i32_60 : i32
    %c0_i32_61 = arith.constant 0 : i32
    %240 = arith.addi %239, %c0_i32_61 : i32
    %241 = arith.index_cast %240 : i32 to index
    %242 = memref.load %arg1[%241] : memref<48xf32, #tpu.memory_space<smem>>
    %243 = vector.broadcast %242 : f32 to vector<2x128xf32>
    %244 = arith.mulf %243, %1 : vector<2x128xf32>
    %245 = arith.addf %238, %244 : vector<2x128xf32>
    %c15_i32_62 = arith.constant 15 : i32
    %246 = arith.addi %9, %c15_i32_62 : i32
    %c1_i32_63 = arith.constant 1 : i32
    %247 = arith.addi %246, %c1_i32_63 : i32
    %248 = arith.index_cast %247 : i32 to index
    %249 = memref.load %arg1[%248] : memref<48xf32, #tpu.memory_space<smem>>
    %250 = vector.broadcast %249 : f32 to vector<2x128xf32>
    %251 = arith.mulf %250, %3 : vector<2x128xf32>
    %252 = arith.addf %245, %251 : vector<2x128xf32>
    %cst_64 = arith.constant 9.99999971E-10 : f32
    %253 = vector.broadcast %cst_64 : f32 to vector<2x128xf32>
    %254 = arith.maximumf %252, %253 : vector<2x128xf32>
    %255 = math.log %254 : vector<2x128xf32>
    %256 = arith.mulf %254, %255 : vector<2x128xf32>
    %c10_i32 = arith.constant 10 : i32
    %257 = arith.addi %10, %c10_i32 : i32
    %c0_i32_65 = arith.constant 0 : i32
    %258 = arith.addi %257, %c0_i32_65 : i32
    %259 = arith.index_cast %258 : i32 to index
    %260 = memref.load %arg2[%259] : memref<32xf32, #tpu.memory_space<smem>>
    %261 = vector.broadcast %260 : f32 to vector<2x128xf32>
    %262 = arith.mulf %261, %256 : vector<2x128xf32>
    %263 = arith.addf %225, %262 : vector<2x128xf32>
    %c10_i32_66 = arith.constant 10 : i32
    %264 = arith.addi %10, %c10_i32_66 : i32
    %c1_i32_67 = arith.constant 1 : i32
    %265 = arith.addi %264, %c1_i32_67 : i32
    %266 = arith.index_cast %265 : i32 to index
    %267 = memref.load %arg2[%266] : memref<32xf32, #tpu.memory_space<smem>>
    %268 = vector.broadcast %267 : f32 to vector<2x128xf32>
    %269 = arith.mulf %268, %256 : vector<2x128xf32>
    %270 = arith.addf %232, %269 : vector<2x128xf32>
    %c18_i32 = arith.constant 18 : i32
    %271 = arith.addi %9, %c18_i32 : i32
    %c2_i32_68 = arith.constant 2 : i32
    %272 = arith.addi %271, %c2_i32_68 : i32
    %273 = arith.index_cast %272 : i32 to index
    %274 = memref.load %arg1[%273] : memref<48xf32, #tpu.memory_space<smem>>
    %275 = vector.broadcast %274 : f32 to vector<2x128xf32>
    %276 = arith.addf %5, %275 : vector<2x128xf32>
    %c18_i32_69 = arith.constant 18 : i32
    %277 = arith.addi %9, %c18_i32_69 : i32
    %c0_i32_70 = arith.constant 0 : i32
    %278 = arith.addi %277, %c0_i32_70 : i32
    %279 = arith.index_cast %278 : i32 to index
    %280 = memref.load %arg1[%279] : memref<48xf32, #tpu.memory_space<smem>>
    %281 = vector.broadcast %280 : f32 to vector<2x128xf32>
    %282 = arith.mulf %281, %1 : vector<2x128xf32>
    %283 = arith.addf %276, %282 : vector<2x128xf32>
    %c18_i32_71 = arith.constant 18 : i32
    %284 = arith.addi %9, %c18_i32_71 : i32
    %c1_i32_72 = arith.constant 1 : i32
    %285 = arith.addi %284, %c1_i32_72 : i32
    %286 = arith.index_cast %285 : i32 to index
    %287 = memref.load %arg1[%286] : memref<48xf32, #tpu.memory_space<smem>>
    %288 = vector.broadcast %287 : f32 to vector<2x128xf32>
    %289 = arith.mulf %288, %3 : vector<2x128xf32>
    %290 = arith.addf %283, %289 : vector<2x128xf32>
    %cst_73 = arith.constant 9.99999971E-10 : f32
    %291 = vector.broadcast %cst_73 : f32 to vector<2x128xf32>
    %292 = arith.maximumf %290, %291 : vector<2x128xf32>
    %293 = math.log %292 : vector<2x128xf32>
    %294 = arith.mulf %292, %293 : vector<2x128xf32>
    %c12_i32_74 = arith.constant 12 : i32
    %295 = arith.addi %10, %c12_i32_74 : i32
    %c0_i32_75 = arith.constant 0 : i32
    %296 = arith.addi %295, %c0_i32_75 : i32
    %297 = arith.index_cast %296 : i32 to index
    %298 = memref.load %arg2[%297] : memref<32xf32, #tpu.memory_space<smem>>
    %299 = vector.broadcast %298 : f32 to vector<2x128xf32>
    %300 = arith.mulf %299, %294 : vector<2x128xf32>
    %301 = arith.addf %263, %300 : vector<2x128xf32>
    %c12_i32_76 = arith.constant 12 : i32
    %302 = arith.addi %10, %c12_i32_76 : i32
    %c1_i32_77 = arith.constant 1 : i32
    %303 = arith.addi %302, %c1_i32_77 : i32
    %304 = arith.index_cast %303 : i32 to index
    %305 = memref.load %arg2[%304] : memref<32xf32, #tpu.memory_space<smem>>
    %306 = vector.broadcast %305 : f32 to vector<2x128xf32>
    %307 = arith.mulf %306, %294 : vector<2x128xf32>
    %308 = arith.addf %270, %307 : vector<2x128xf32>
    %c21_i32 = arith.constant 21 : i32
    %309 = arith.addi %9, %c21_i32 : i32
    %c2_i32_78 = arith.constant 2 : i32
    %310 = arith.addi %309, %c2_i32_78 : i32
    %311 = arith.index_cast %310 : i32 to index
    %312 = memref.load %arg1[%311] : memref<48xf32, #tpu.memory_space<smem>>
    %313 = vector.broadcast %312 : f32 to vector<2x128xf32>
    %314 = arith.addf %5, %313 : vector<2x128xf32>
    %c21_i32_79 = arith.constant 21 : i32
    %315 = arith.addi %9, %c21_i32_79 : i32
    %c0_i32_80 = arith.constant 0 : i32
    %316 = arith.addi %315, %c0_i32_80 : i32
    %317 = arith.index_cast %316 : i32 to index
    %318 = memref.load %arg1[%317] : memref<48xf32, #tpu.memory_space<smem>>
    %319 = vector.broadcast %318 : f32 to vector<2x128xf32>
    %320 = arith.mulf %319, %1 : vector<2x128xf32>
    %321 = arith.addf %314, %320 : vector<2x128xf32>
    %c21_i32_81 = arith.constant 21 : i32
    %322 = arith.addi %9, %c21_i32_81 : i32
    %c1_i32_82 = arith.constant 1 : i32
    %323 = arith.addi %322, %c1_i32_82 : i32
    %324 = arith.index_cast %323 : i32 to index
    %325 = memref.load %arg1[%324] : memref<48xf32, #tpu.memory_space<smem>>
    %326 = vector.broadcast %325 : f32 to vector<2x128xf32>
    %327 = arith.mulf %326, %3 : vector<2x128xf32>
    %328 = arith.addf %321, %327 : vector<2x128xf32>
    %cst_83 = arith.constant 9.99999971E-10 : f32
    %329 = vector.broadcast %cst_83 : f32 to vector<2x128xf32>
    %330 = arith.maximumf %328, %329 : vector<2x128xf32>
    %331 = math.log %330 : vector<2x128xf32>
    %332 = arith.mulf %330, %331 : vector<2x128xf32>
    %c14_i32 = arith.constant 14 : i32
    %333 = arith.addi %10, %c14_i32 : i32
    %c0_i32_84 = arith.constant 0 : i32
    %334 = arith.addi %333, %c0_i32_84 : i32
    %335 = arith.index_cast %334 : i32 to index
    %336 = memref.load %arg2[%335] : memref<32xf32, #tpu.memory_space<smem>>
    %337 = vector.broadcast %336 : f32 to vector<2x128xf32>
    %338 = arith.mulf %337, %332 : vector<2x128xf32>
    %339 = arith.addf %301, %338 : vector<2x128xf32>
    %c14_i32_85 = arith.constant 14 : i32
    %340 = arith.addi %10, %c14_i32_85 : i32
    %c1_i32_86 = arith.constant 1 : i32
    %341 = arith.addi %340, %c1_i32_86 : i32
    %342 = arith.index_cast %341 : i32 to index
    %343 = memref.load %arg2[%342] : memref<32xf32, #tpu.memory_space<smem>>
    %344 = vector.broadcast %343 : f32 to vector<2x128xf32>
    %345 = arith.mulf %344, %332 : vector<2x128xf32>
    %346 = arith.addf %308, %345 : vector<2x128xf32>
    %347 = tpu.concatenate %339, %346 in 1 : vector<2x128xf32>, vector<2x128xf32> -> vector<2x256xf32>
    %c0_87 = arith.constant 0 : index
    %c0_88 = arith.constant 0 : index
    %348 = vector.load %arg5[%c0_87, %c0_88] : memref<256x256xf32, #tpu.memory_space<vmem>>, vector<256x256xf32>
    %cst_89 = arith.constant dense<0.000000e+00> : vector<2x256xf32>
    %349 = tpu.matmul %347, %348, %cst_89 {dimension_numbers = #tpu.dot_dimension_numbers<[1], [0], [0], [1], [0, 0, 1, 1], [], []>, precision = #tpu.contract_precision<fp32>} : vector<2x256xf32>, vector<256x256xf32>, vector<2x256xf32> -> vector<2x256xf32>
    %350 = arith.index_cast %c0_i32 : i32 to index
    %c0_90 = arith.constant 0 : index
    %c0_91 = arith.constant 0 : index
    %351 = vector.load %arg6[%350, %c0_90, %c0_91] : memref<1x2x256xf32, #tpu.memory_space<vmem>>, vector<1x2x256xf32>
    %352 = vector.shape_cast %351 : vector<1x2x256xf32> to vector<2x256xf32>
    %353 = vector.shape_cast %349 : vector<2x256xf32> to vector<1x2x256xf32>
    tpu.vector_store %arg6[%350, %c0_90, %c0_91], %353 {strides = array<i32>} : memref<1x2x256xf32, #tpu.memory_space<vmem>>, vector<1x2x256xf32>,
    %c1_i32_92 = arith.constant 1 : i32
    return
  }
  func.func @transform_0(%arg0: i32) -> i32 {
    %c0_i32 = arith.constant 0 : i32
    %c0_i32_0 = arith.constant 0 : i32
    return %c0_i32 : i32
  }
  func.func @transform_1(%arg0: i32) -> i32 {
    %c0_i32 = arith.constant 0 : i32
    %c0_i32_0 = arith.constant 0 : i32
    return %c0_i32 : i32
  }
  func.func @transform_2(%arg0: i32) -> i32 {
    %c0_i32 = arith.constant 0 : i32
    %c0_i32_0 = arith.constant 0 : i32
    return %c0_i32 : i32
  }
  func.func @transform_3(%arg0: i32) -> (i32, i32, i32) {
    %c0_i32 = arith.constant 0 : i32
    %c0_i32_0 = arith.constant 0 : i32
    %c0_i32_1 = arith.constant 0 : i32
    %c0_i32_2 = arith.constant 0 : i32
    return %c0_i32, %c0_i32_0, %c0_i32_1 : i32, i32, i32
  }
  func.func @transform_4(%arg0: i32) -> (i32, i32) {
    %c0_i32 = arith.constant 0 : i32
    %c0_i32_0 = arith.constant 0 : i32
    %c0_i32_1 = arith.constant 0 : i32
    return %c0_i32, %c0_i32_0 : i32, i32
  }
  func.func @transform_5(%arg0: i32) -> (i32, i32, i32) {
    %c0_i32 = arith.constant 0 : i32
    %c0_i32_0 = arith.constant 0 : i32
    %c0_i32_1 = arith.constant 0 : i32
    return %arg0, %c0_i32, %c0_i32_0 : i32, i32, i32
  }
}

</mosaic_0001>

<llo_original>
// kernel: tpu_custom_call.1
$region0: #{tpu_custom_call.1}
  #allocation0 [shape = 'u32[]', space=smem, size = 0x4, offset = 0x4, fixed_abs, tag = 'smem constant byte address 0x4 - core index']
  #allocation1 [shape = 'u32[144,128]{1,0:T(1,128)}', space=vmem, size = 0x12000, scoped, tag = 'internal scratch']
  %s0 = inlined_call_operand.hbm [shape: f32[48], index: 0, kind: input, shape index: {}]
  %s1 = inlined_call_operand.vmem [shape: f32[32], index: 1, kind: input, shape index: {}]
  %s2 = inlined_call_operand.vmem [shape: f32[12], index: 2, kind: input, shape index: {}]
  %s3 = inlined_call_operand.hbm [shape: f32[3,2,128], index: 3, kind: input, shape index: {}]
  %s4 = inlined_call_operand.hbm [shape: f32[256,256], index: 4, kind: input, shape index: {}]
  %s5 = inlined_call_operand.hbm [shape: f32[2,2,256], index: 5, kind: output, shape index: {}]
  %s6 = sld [smem:[#allocation0]]
  $region73: #{tpu_custom_call.1} parent=0
    _
  %s8 = ssub.s32 1, %s6
  %s9 = scalar_select 0, %s8, %s6
  $region1: #{tpu_custom_call.1} parent=0
    #allocation2 [shape = 'u8[512]{0}', space=smem, size = 0x200, scoped, tag = 'input window, operand 0, single buffered']
    #allocation3 [shape = 's32[2]{0}', space=sflag, size = 0x8, scoped, tag = 'scoped memory for tpu_custom_call.1']
    #allocation4 [shape = 's32[2]{0}', space=sflag, size = 0x8, scoped, tag = 'scoped memory for tpu_custom_call.1']
    #allocation5 [shape = 's32[2]{0}', space=sflag, size = 0x8, scoped, tag = 'scoped memory for tpu_custom_call.1']
    #allocation6 [shape = 's32[2]{0}', space=sflag, size = 0x8, scoped, tag = 'scoped memory for tpu_custom_call.1']
    #allocation7 [shape = 'u8[512]{0}', space=smem, size = 0x200, scoped, tag = 'input window, operand 1, single buffered']
    #allocation8 [shape = 'u8[512]{0}', space=smem, size = 0x200, scoped, tag = 'input window, operand 2, single buffered']
    #allocation9 [shape = 's32[1]{0}', space=sflag, size = 0x4, scoped, tag = 'scoped memory for tpu_custom_call.1']
    #allocation10 [shape = 'u8[3072]{0}', space=vmem, size = 0xc00, scoped, tag = 'input window, operand 3, single buffered']
    #allocation11 [shape = 'u8[262144]{0}', space=vmem, size = 0x40000, scoped, tag = 'input window, operand 4, single buffered']
    #allocation12 [shape = 's32[1]{0}', space=sflag, size = 0x4, scoped, tag = 'scoped memory for tpu_custom_call.1']
    #allocation13 [shape = 'u8[4096]{0}', space=vmem, size = 0x1000, scoped, tag = 'output window, operand 0']
    %10 = vsyncpa [#allocation5], 0
    %11 = vsyncpa [#allocation6], 0
    %12 = vsyncpa [#allocation9], 0
    %13 = vsyncpa [#allocation3], 0
    %14 = vsyncpa [#allocation12], 0
    %15 = vsyncpa [#allocation4], 0
    %s16 = scalar_lea.sflag [#allocation4], 1
    %17 = vsyncpa %s16, 0
    loop: start=0, step=1, limit=4
    $region2: #{tpu_custom_call.1} parent=1 // loop_pre_header
      _
    $region3: #{tpu_custom_call.1} parent=1 // loop_header
      %s19 = sphi 0, %s23
      %p20 = scmp.ge.s32.totalorder %s19, 4
      %s27 = sphi 0, %s27
      %s29 = sphi 0, %s27
      %s30 = sphi 0, %s29
      %s44 = sphi 0, %s30
      %s48 = sphi 0, %s48
      %s50 = sphi 0, %s48
      %s51 = sphi 0, %s50
      %s65 = sphi 0, %s51
      %s69 = sphi 0, %s69
      %s71 = sphi 0, %s69
      %s72 = sphi 0, %s71
      %s86 = sphi 0, %s72
      %s90 = sphi 0, %s90
      %s92 = sphi 0, %s90
      %s93 = sphi 0, %s92
      %s107 = sphi 0, %s93
      %s111 = sphi 0, %s111
      %s113 = sphi 0, %s111
      %s114 = sphi 0, %s113
      %s128 = sphi 0, %s114
      %s134 = sphi 0, %s136
      %s137 = sphi 0, %s134
      %s138 = sphi 0, %s137
      %s154 = sphi 0, %s138
    $region4: #{tpu_custom_call.1} parent=1 // loop_header_branch
      %22 = sbr.rel (%p20) target = $region8
    $region5: #{tpu_custom_call.1} parent=1 // loop_body
      %s24 = ssub.s32 %s19, 1
      %s25 = ssub.s32 %s19, 2
      %s26 = sadd.s32 %s19, 1
      %s28 = sadd.s32 %s27, 1
      %p31 = scmp.eq.s32.totalorder %s19, 1
      %p32 = scmp.ne.s32.totalorder %s27, %s29
      %p33 = scmp.eq.s32.totalorder %s19, 0
      %p34 = por %p32, %p33
      %p35 = scmp.ne.s32.totalorder %s27, %s29
      %p36 = scmp.eq.s32.totalorder %s24, 1
      %p37 = por %p35, %p36
      %p38 = scmp.ne.s32.totalorder %s29, %s30
      %p39 = scmp.eq.s32.totalorder %s24, 0
      %p40 = por %p38, %p39
      %p41 = scmp.ne.s32.totalorder %s29, %s30
      %p42 = scmp.eq.s32.totalorder %s25, 1
      %p43 = por %p41, %p42
      %p45 = scmp.ne.s32.totalorder %s30, %s44
      %p46 = scmp.eq.s32.totalorder %s25, 0
      %p47 = por %p45, %p46
      %s49 = sadd.s32 %s48, 1
      %p52 = scmp.eq.s32.totalorder %s19, 1
      %p53 = scmp.ne.s32.totalorder %s48, %s50
      %p54 = scmp.eq.s32.totalorder %s19, 0
      %p55 = por %p53, %p54
      %p56 = scmp.ne.s32.totalorder %s48, %s50
      %p57 = scmp.eq.s32.totalorder %s24, 1
      %p58 = por %p56, %p57
      %p59 = scmp.ne.s32.totalorder %s50, %s51
      %p60 = scmp.eq.s32.totalorder %s24, 0
      %p61 = por %p59, %p60
      %p62 = scmp.ne.s32.totalorder %s50, %s51
      %p63 = scmp.eq.s32.totalorder %s25, 1
      %p64 = por %p62, %p63
      %p66 = scmp.ne.s32.totalorder %s51, %s65
      %p67 = scmp.eq.s32.totalorder %s25, 0
      %p68 = por %p66, %p67
      %s70 = sadd.s32 %s69, 1
      %p73 = scmp.eq.s32.totalorder %s19, 1
      %p74 = scmp.ne.s32.totalorder %s69, %s71
      %p75 = scmp.eq.s32.totalorder %s19, 0
      %p76 = por %p74, %p75
      %p77 = scmp.ne.s32.totalorder %s69, %s71
      %p78 = scmp.eq.s32.totalorder %s24, 1
      %p79 = por %p77, %p78
      %p80 = scmp.ne.s32.totalorder %s71, %s72
      %p81 = scmp.eq.s32.totalorder %s24, 0
      %p82 = por %p80, %p81
      %p83 = scmp.ne.s32.totalorder %s71, %s72
      %p84 = scmp.eq.s32.totalorder %s25, 1
      %p85 = por %p83, %p84
      %p87 = scmp.ne.s32.totalorder %s72, %s86
      %p88 = scmp.eq.s32.totalorder %s25, 0
      %p89 = por %p87, %p88
      %s91 = sadd.s32 %s90, 1
      %p94 = scmp.eq.s32.totalorder %s19, 1
      %p95 = scmp.ne.s32.totalorder %s90, %s92
      %p96 = scmp.eq.s32.totalorder %s19, 0
      %p97 = por %p95, %p96
      %p98 = scmp.ne.s32.totalorder %s90, %s92
      %p99 = scmp.eq.s32.totalorder %s24, 1
      %p100 = por %p98, %p99
      %p101 = scmp.ne.s32.totalorder %s92, %s93
      %p102 = scmp.eq.s32.totalorder %s24, 0
      %p103 = por %p101, %p102
      %p104 = scmp.ne.s32.totalorder %s92, %s93
      %p105 = scmp.eq.s32.totalorder %s25, 1
      %p106 = por %p104, %p105
      %p108 = scmp.ne.s32.totalorder %s93, %s107
      %p109 = scmp.eq.s32.totalorder %s25, 0
      %p110 = por %p108, %p109
      %s112 = sadd.s32 %s111, 1
      %p115 = scmp.eq.s32.totalorder %s19, 1
      %p116 = scmp.ne.s32.totalorder %s111, %s113
      %p117 = scmp.eq.s32.totalorder %s19, 0
      %p118 = por %p116, %p117
      %p119 = scmp.ne.s32.totalorder %s111, %s113
      %p120 = scmp.eq.s32.totalorder %s24, 1
      %p121 = por %p119, %p120
      %p122 = scmp.ne.s32.totalorder %s113, %s114
      %p123 = scmp.eq.s32.totalorder %s24, 0
      %p124 = por %p122, %p123
      %p125 = scmp.ne.s32.totalorder %s113, %s114
      %p126 = scmp.eq.s32.totalorder %s25, 1
      %p127 = por %p125, %p126
      %p129 = scmp.ne.s32.totalorder %s114, %s128
      %p130 = scmp.eq.s32.totalorder %s25, 0
      %p131 = por %p129, %p130
      %s132 = ssub.s32 %s19, %s26
      %p133 = scmp.eq.s32.totalorder %s132, 0
      %s135 = sadd.s32 %s134, 1
      %s136 = scalar_select %p133, %s134, %s135
      %p139 = pneg %p133
      %p140 = scmp.eq.s32.totalorder %s19, 1
      %p141 = por %p139, %p140
      %p142 = scmp.ne.s32.totalorder %s134, %s137
      %p143 = scmp.eq.s32.totalorder %s19, 0
      %p144 = por %p142, %p143
      %p145 = scmp.ne.s32.totalorder %s134, %s137
      %p146 = scmp.eq.s32.totalorder %s24, 1
      %p147 = por %p145, %p146
      %p148 = scmp.ne.s32.totalorder %s137, %s138
      %p149 = scmp.eq.s32.totalorder %s24, 0
      %p150 = por %p148, %p149
      %p151 = scmp.ne.s32.totalorder %s137, %s138
      %p152 = scmp.eq.s32.totalorder %s25, 1
      %p153 = por %p151, %p152
      %p155 = scmp.ne.s32.totalorder %s138, %s154
      %p156 = scmp.eq.s32.totalorder %s25, 0
      %p157 = por %p155, %p156
      %p158 = scmp.le.s32.totalorder 1, %s19
      %p159 = scmp.lt.s32.totalorder %s19, 3
      %p160 = pnand %p158, %p159
      %p161 = pneg %p160
      // Predicated region
      $region9: #{tpu_custom_call.1} parent=5 // pred_check
        _
      $region10: #{tpu_custom_call.1} parent=5 // pred_check_branch
        %163 = sbr.rel (%p160) target = $region12
      $region11: #{tpu_custom_call.1} parent=5 // pred_region
        %s164 = ssub.s32 %s19, 1
        // Predicated region
        $region13: #{tpu_custom_call.1} parent=11 // pred_check
          %p165 = pneg %p40
        $region14: #{tpu_custom_call.1} parent=11 // pred_check_branch
          %167 = sbr.rel (%p165) target = $region16
        $region15: #{tpu_custom_call.1} parent=11 // pred_region
          %s169 = ssub.s32 16, 16
          %170 = vsyncadd [#allocation5], %s169
          %173 = dma.hbm_to_smem %s0, 16, [#allocation2], [#allocation5]
        $region16: #{tpu_custom_call.1} parent=11 // pred_fallthru
          _
        // Predicated region
        $region17: #{tpu_custom_call.1} parent=11 // pred_check
          %p174 = pneg %p61
        $region18: #{tpu_custom_call.1} parent=11 // pred_check_branch
          %176 = sbr.rel (%p174) target = $region20
        $region19: #{tpu_custom_call.1} parent=11 // pred_region
          %s178 = ssub.s32 16, 16
          %179 = vsyncadd [#allocation6], %s178
          %s181 = sshll.u32 %s1, 4
          %s182 = int_to_ptr.vmem [resolvable:$true] %s181
          %184 = dma.vmem_to_smem %s182, 16, [#allocation7], [#allocation6]
        $region20: #{tpu_custom_call.1} parent=11 // pred_fallthru
          _
        // Predicated region
        $region21: #{tpu_custom_call.1} parent=11 // pred_check
          %p185 = pneg %p82
        $region22: #{tpu_custom_call.1} parent=11 // pred_check_branch
          %187 = sbr.rel (%p185) target = $region24
        $region23: #{tpu_custom_call.1} parent=11 // pred_region
          %s189 = ssub.s32 16, 16
          %190 = vsyncadd [#allocation9], %s189
          %s192 = sshll.u32 %s2, 4
          %s193 = int_to_ptr.vmem [resolvable:$true] %s192
          %195 = dma.vmem_to_smem %s193, 16, [#allocation8], [#allocation9]
        $region24: #{tpu_custom_call.1} parent=11 // pred_fallthru
          _
        // Predicated region
        $region25: #{tpu_custom_call.1} parent=11 // pred_check
          %p196 = pneg %p103
        $region26: #{tpu_custom_call.1} parent=11 // pred_check_branch
          %198 = sbr.rel (%p196) target = $region28
        $region27: #{tpu_custom_call.1} parent=11 // pred_region
          %s200 = ssub.s32 96, 96
          %201 = vsyncadd [#allocation3], %s200
          %s202 = sshll.u32 [#allocation10], 4
          %s203 = int_to_ptr.vmem [resolvable:$true] %s202
          %208 = dma.hbm_to_vmem [thread:$0]  %s3, 96, %s203, [#allocation3], 32, 32, 2
        $region28: #{tpu_custom_call.1} parent=11 // pred_fallthru
          _
        // Predicated region
        $region29: #{tpu_custom_call.1} parent=11 // pred_check
          %p209 = pneg %p124
        $region30: #{tpu_custom_call.1} parent=11 // pred_check_branch
          %211 = sbr.rel (%p209) target = $region32
        $region31: #{tpu_custom_call.1} parent=11 // pred_region
          %s213 = ssub.s32 8192, 8192
          %214 = vsyncadd [#allocation12], %s213
          %s215 = sshll.u32 [#allocation11], 4
          %s216 = int_to_ptr.vmem [resolvable:$true] %s215
          %221 = dma.hbm_to_vmem [thread:$0]  %s4, 8192, %s216, [#allocation12], 256, 256, 16
        $region32: #{tpu_custom_call.1} parent=11 // pred_fallthru
          _
      $region12: #{tpu_custom_call.1} parent=5 // pred_fallthru
        _
      %p222 = scmp.lt.s32.totalorder %s19, 2
      // Predicated region
      $region33: #{tpu_custom_call.1} parent=5 // pred_check
        %p223 = pneg %p222
      $region34: #{tpu_custom_call.1} parent=5 // pred_check_branch
        %225 = sbr.rel (%p223) target = $region36
      $region35: #{tpu_custom_call.1} parent=5 // pred_region
        _
      $region36: #{tpu_custom_call.1} parent=5 // pred_fallthru
        _
      %p226 = scmp.le.s32.totalorder 1, %s19
      %p227 = scmp.lt.s32.totalorder %s19, 3
      %p228 = pnand %p226, %p227
      %p229 = pneg %p228
      // Predicated region
      $region37: #{tpu_custom_call.1} parent=5 // pred_check
        _
      $region38: #{tpu_custom_call.1} parent=5 // pred_check_branch
        %231 = sbr.rel (%p228) target = $region40
      $region39: #{tpu_custom_call.1} parent=5 // pred_region
        %s232 = ssub.s32 %s19, 1
        // Predicated region
        $region41: #{tpu_custom_call.1} parent=39 // pred_check
          %p233 = pneg %p40
        $region42: #{tpu_custom_call.1} parent=39 // pred_check_branch
          %235 = sbr.rel (%p233) target = $region44
        $region43: #{tpu_custom_call.1} parent=39 // pred_region
          %236 = dma.done [#allocation5], 16
        $region44: #{tpu_custom_call.1} parent=39 // pred_fallthru
          _
        // Predicated region
        $region45: #{tpu_custom_call.1} parent=39 // pred_check
          %p237 = pneg %p61
        $region46: #{tpu_custom_call.1} parent=39 // pred_check_branch
          %239 = sbr.rel (%p237) target = $region48
        $region47: #{tpu_custom_call.1} parent=39 // pred_region
          %240 = dma.done [#allocation6], 16
        $region48: #{tpu_custom_call.1} parent=39 // pred_fallthru
          _
        // Predicated region
        $region49: #{tpu_custom_call.1} parent=39 // pred_check
          %p241 = pneg %p82
        $region50: #{tpu_custom_call.1} parent=39 // pred_check_branch
          %243 = sbr.rel (%p241) target = $region52
        $region51: #{tpu_custom_call.1} parent=39 // pred_region
          %244 = dma.done [#allocation9], 16
        $region52: #{tpu_custom_call.1} parent=39 // pred_fallthru
          _
        // Predicated region
        $region53: #{tpu_custom_call.1} parent=39 // pred_check
          %p245 = pneg %p103
        $region54: #{tpu_custom_call.1} parent=39 // pred_check_branch
          %247 = sbr.rel (%p245) target = $region56
        $region55: #{tpu_custom_call.1} parent=39 // pred_region
          %248 = dma.done [#allocation3], 96
        $region56: #{tpu_custom_call.1} parent=39 // pred_fallthru
          _
        // Predicated region
        $region57: #{tpu_custom_call.1} parent=39 // pred_check
          %p249 = pneg %p124
        $region58: #{tpu_custom_call.1} parent=39 // pred_check_branch
          %251 = sbr.rel (%p249) target = $region60
        $region59: #{tpu_custom_call.1} parent=39 // pred_region
          %252 = dma.done [#allocation12], 8192
        $region60: #{tpu_custom_call.1} parent=39 // pred_fallthru
          _
        %253 = sfence
        %p254 = pneg %p40
        %p255 = pneg %p37
        %p256 = pneg %p61
        %p257 = pneg %p58
        %p258 = pneg %p82
        %p259 = pneg %p79
        %p260 = pneg %p103
        %p261 = pneg %p100
        %p262 = pneg %p124
        %p263 = pneg %p121
        %p264 = pneg %p150
        %p265 = pneg %p147
        %s266 = sand.u32 %s137, 1
        %s267 = scalar_lea.sflag [#allocation4], %s266
        %s268 = sand.u32 %s137, 1
        %s269 = smul.addr %s268, 4
        %s270 = scalar_lea.vmem [#allocation13], %s269
        %v271 = vld [vmem:[#allocation10] sm:$0x3]
        %s272 = scalar_lea.vmem [#allocation10], 2
        %v273 = vld [vmem:[%s272] sm:$0x3]
        %s274 = scalar_lea.vmem [#allocation10], 4
        %v275 = vld [vmem:[%s274] sm:$0x3]
        %s276 = smul.u32 %s24, 6
        %s277 = smul.u32 %s24, 24
        %s278 = smul.u32 %s24, 16
        %s279 = sld [smem:[#allocation8 + %s276]]
        %s280 = sadd.s32 %s276, 2
        %s281 = sld [smem:[#allocation8 + %s280]]
        %v282 = vstv %s281
        %v283 = vmul.f32 %v282, %v271
        %v284 = vstv %s279
        %v285 = vadd.f32 %v284, %v283
        %s286 = sadd.s32 %s276, 4
        %s287 = sld [smem:[#allocation8 + %s286]]
        %v288 = vstv %s287
        %v289 = vmul.f32 %v288, %v273
        %v290 = vadd.f32 %v285, %v289
        %s291 = sadd.s32 %s276, 1
        %s292 = sld [smem:[#allocation8 + %s291]]
        %s293 = sadd.s32 %s276, 3
        %s294 = sld [smem:[#allocation8 + %s293]]
        %v295 = vstv %s294
        %v296 = vmul.f32 %v295, %v271
        %v297 = vstv %s292
        %v298 = vadd.f32 %v297, %v296
        %s299 = sadd.s32 %s276, 5
        %s300 = sld [smem:[#allocation8 + %s299]]
        %v301 = vstv %s300
        %v302 = vmul.f32 %v301, %v273
        %v303 = vadd.f32 %v298, %v302
        %s304 = sadd.s32 %s277, 2
        %s305 = sld [smem:[#allocation2 + %s304]]
        %v306 = vstv %s305
        %v307 = vadd.f32 %v275, %v306
        %s308 = sld [smem:[#allocation2 + %s277]]
        %v309 = vstv %s308
        %v310 = vmul.f32 %v309, %v271
        %v311 = vadd.f32 %v307, %v310
        %s312 = sadd.s32 %s277, 1
        %s313 = sld [smem:[#allocation2 + %s312]]
        %v314 = vstv %s313
        %v315 = vmul.f32 %v314, %v273
        %v316 = vadd.f32 %v311, %v315
        %v317 = vmax.f32 %v316, 1e-09
        %v318 = vlog2.pop %v317
        %v319 = vmul.f32 %v318, 0.6931472
        %v320 = vmul.f32 %v317, %v319
        %s321 = sld [smem:[#allocation7 + %s278]]
        %v322 = vstv %s321
        %v323 = vmul.f32 %v322, %v320
        %v324 = vadd.f32 %v290, %v323
        %s325 = sadd.s32 %s278, 1
        %s326 = sld [smem:[#allocation7 + %s325]]
        %v327 = vstv %s326
        %v328 = vmul.f32 %v327, %v320
        %v329 = vadd.f32 %v303, %v328
        %s330 = sadd.s32 %s277, 5
        %s331 = sld [smem:[#allocation2 + %s330]]
        %v332 = vstv %s331
        %v333 = vadd.f32 %v275, %v332
        %s334 = sadd.s32 %s277, 3
        %s335 = sld [smem:[#allocation2 + %s334]]
        %v336 = vstv %s335
        %v337 = vmul.f32 %v336, %v271
        %v338 = vadd.f32 %v333, %v337
        %s339 = sadd.s32 %s277, 4
        %s340 = sld [smem:[#allocation2 + %s339]]
        %v341 = vstv %s340
        %v342 = vmul.f32 %v341, %v273
        %v343 = vadd.f32 %v338, %v342
        %v344 = vmax.f32 %v343, 1e-09
        %v345 = vlog2.pop %v344
        %v346 = vmul.f32 %v345, 0.6931472
        %v347 = vmul.f32 %v344, %v346
        %s348 = sadd.s32 %s278, 2
        %s349 = sld [smem:[#allocation7 + %s348]]
        %v350 = vstv %s349
        %v351 = vmul.f32 %v350, %v347
        %v352 = vadd.f32 %v324, %v351
        %s353 = sadd.s32 %s278, 3
        %s354 = sld [smem:[#allocation7 + %s353]]
        %v355 = vstv %s354
        %v356 = vmul.f32 %v355, %v347
        %v357 = vadd.f32 %v329, %v356
        %s358 = sadd.s32 %s277, 8
        %s359 = sld [smem:[#allocation2 + %s358]]
        %v360 = vstv %s359
        %v361 = vadd.f32 %v275, %v360
        %s362 = sadd.s32 %s277, 6
        %s363 = sld [smem:[#allocation2 + %s362]]
        %v364 = vstv %s363
        %v365 = vmul.f32 %v364, %v271
        %v366 = vadd.f32 %v361, %v365
        %s367 = sadd.s32 %s277, 7
        %s368 = sld [smem:[#allocation2 + %s367]]
        %v369 = vstv %s368
        %v370 = vmul.f32 %v369, %v273
        %v371 = vadd.f32 %v366, %v370
        %v372 = vmax.f32 %v371, 1e-09
        %v373 = vlog2.pop %v372
        %v374 = vmul.f32 %v373, 0.6931472
        %v375 = vmul.f32 %v372, %v374
        %s376 = sadd.s32 %s278, 4
        %s377 = sld [smem:[#allocation7 + %s376]]
        %v378 = vstv %s377
        %v379 = vmul.f32 %v378, %v375
        %v380 = vadd.f32 %v352, %v379
        %s381 = sadd.s32 %s278, 5
        %s382 = sld [smem:[#allocation7 + %s381]]
        %v383 = vstv %s382
        %v384 = vmul.f32 %v383, %v375
        %v385 = vadd.f32 %v357, %v384
        %s386 = sadd.s32 %s277, 11
        %s387 = sld [smem:[#allocation2 + %s386]]
        %v388 = vstv %s387
        %v389 = vadd.f32 %v275, %v388
        %s390 = sadd.s32 %s277, 9
        %s391 = sld [smem:[#allocation2 + %s390]]
        %v392 = vstv %s391
        %v393 = vmul.f32 %v392, %v271
        %v394 = vadd.f32 %v389, %v393
        %s395 = sadd.s32 %s277, 10
        %s396 = sld [smem:[#allocation2 + %s395]]
        %v397 = vstv %s396
        %v398 = vmul.f32 %v397, %v273
        %v399 = vadd.f32 %v394, %v398
        %v400 = vmax.f32 %v399, 1e-09
        %v401 = vlog2.pop %v400
        %v402 = vmul.f32 %v401, 0.6931472
        %v403 = vmul.f32 %v400, %v402
        %s404 = sadd.s32 %s278, 6
        %s405 = sld [smem:[#allocation7 + %s404]]
        %v406 = vstv %s405
        %v407 = vmul.f32 %v406, %v403
        %v408 = vadd.f32 %v380, %v407
        %s409 = sadd.s32 %s278, 7
        %s410 = sld [smem:[#allocation7 + %s409]]
        %v411 = vstv %s410
        %v412 = vmul.f32 %v411, %v403
        %v413 = vadd.f32 %v385, %v412
        %s414 = sadd.s32 %s277, 14
        %s415 = sld [smem:[#allocation2 + %s414]]
        %v416 = vstv %s415
        %v417 = vadd.f32 %v275, %v416
        %s418 = sadd.s32 %s277, 12
        %s419 = sld [smem:[#allocation2 + %s418]]
        %v420 = vstv %s419
        %v421 = vmul.f32 %v420, %v271
        %v422 = vadd.f32 %v417, %v421
        %s423 = sadd.s32 %s277, 13
        %s424 = sld [smem:[#allocation2 + %s423]]
        %v425 = vstv %s424
        %v426 = vmul.f32 %v425, %v273
        %v427 = vadd.f32 %v422, %v426
        %v428 = vmax.f32 %v427, 1e-09
        %v429 = vlog2.pop %v428
        %v430 = vmul.f32 %v429, 0.6931472
        %v431 = vmul.f32 %v428, %v430
        %s432 = sadd.s32 %s278, 8
        %s433 = sld [smem:[#allocation7 + %s432]]
        %v434 = vstv %s433
        %v435 = vmul.f32 %v434, %v431
        %v436 = vadd.f32 %v408, %v435
        %s437 = sadd.s32 %s278, 9
        %s438 = sld [smem:[#allocation7 + %s437]]
        %v439 = vstv %s438
        %v440 = vmul.f32 %v439, %v431
        %v441 = vadd.f32 %v413, %v440
        %s442 = sadd.s32 %s277, 17
        %s443 = sld [smem:[#allocation2 + %s442]]
        %v444 = vstv %s443
        %v445 = vadd.f32 %v275, %v444
        %s446 = sadd.s32 %s277, 15
        %s447 = sld [smem:[#allocation2 + %s446]]
        %v448 = vstv %s447
        %v449 = vmul.f32 %v448, %v271
        %v450 = vadd.f32 %v445, %v449
        %s451 = sadd.s32 %s277, 16
        %s452 = sld [smem:[#allocation2 + %s451]]
        %v453 = vstv %s452
        %v454 = vmul.f32 %v453, %v273
        %v455 = vadd.f32 %v450, %v454
        %v456 = vmax.f32 %v455, 1e-09
        %v457 = vlog2.pop %v456
        %v458 = vmul.f32 %v457, 0.6931472
        %v459 = vmul.f32 %v456, %v458
        %s460 = sadd.s32 %s278, 10
        %s461 = sld [smem:[#allocation7 + %s460]]
        %v462 = vstv %s461
        %v463 = vmul.f32 %v462, %v459
        %v464 = vadd.f32 %v436, %v463
        %s465 = sadd.s32 %s278, 11
        %s466 = sld [smem:[#allocation7 + %s465]]
        %v467 = vstv %s466
        %v468 = vmul.f32 %v467, %v459
        %v469 = vadd.f32 %v441, %v468
        %s470 = sadd.s32 %s277, 20
        %s471 = sld [smem:[#allocation2 + %s470]]
        %v472 = vstv %s471
        %v473 = vadd.f32 %v275, %v472
        %s474 = sadd.s32 %s277, 18
        %s475 = sld [smem:[#allocation2 + %s474]]
        %v476 = vstv %s475
        %v477 = vmul.f32 %v476, %v271
        %v478 = vadd.f32 %v473, %v477
        %s479 = sadd.s32 %s277, 19
        %s480 = sld [smem:[#allocation2 + %s479]]
        %v481 = vstv %s480
        %v482 = vmul.f32 %v481, %v273
        %v483 = vadd.f32 %v478, %v482
        %v484 = vmax.f32 %v483, 1e-09
        %v485 = vlog2.pop %v484
        %v486 = vmul.f32 %v485, 0.6931472
        %v487 = vmul.f32 %v484, %v486
        %s488 = sadd.s32 %s278, 12
        %s489 = sld [smem:[#allocation7 + %s488]]
        %v490 = vstv %s489
        %v491 = vmul.f32 %v490, %v487
        %v492 = vadd.f32 %v464, %v491
        %s493 = sadd.s32 %s278, 13
        %s494 = sld [smem:[#allocation7 + %s493]]
        %v495 = vstv %s494
        %v496 = vmul.f32 %v495, %v487
        %v497 = vadd.f32 %v469, %v496
        %s498 = sadd.s32 %s277, 23
        %s499 = sld [smem:[#allocation2 + %s498]]
        %v500 = vstv %s499
        %v501 = vadd.f32 %v275, %v500
        %s502 = sadd.s32 %s277, 21
        %s503 = sld [smem:[#allocation2 + %s502]]
        %v504 = vstv %s503
        %v505 = vmul.f32 %v504, %v271
        %v506 = vadd.f32 %v501, %v505
        %s507 = sadd.s32 %s277, 22
        %s508 = sld [smem:[#allocation2 + %s507]]
        %v509 = vstv %s508
        %v510 = vmul.f32 %v509, %v273
        %v511 = vadd.f32 %v506, %v510
        %v512 = vmax.f32 %v511, 1e-09
        %v513 = vlog2.pop %v512
        %v514 = vmul.f32 %v513, 0.6931472
        %v515 = vmul.f32 %v512, %v514
        %s516 = sadd.s32 %s278, 14
        %s517 = sld [smem:[#allocation7 + %s516]]
        %v518 = vstv %s517
        %v519 = vmul.f32 %v518, %v515
        %v520 = vadd.f32 %v492, %v519
        %s521 = sadd.s32 %s278, 15
        %s522 = sld [smem:[#allocation7 + %s521]]
        %v523 = vstv %s522
        %v524 = vmul.f32 %v523, %v515
        %v525 = vadd.f32 %v497, %v524
        %v526 = vld [vmem:[#allocation11] sm:$0xff]
        %v527 = vld [vmem:[#allocation11 + $0x8] sm:$0xff]
        %v528 = vld [vmem:[#allocation11 + $0x10] sm:$0xff]
        %v529 = vld [vmem:[#allocation11 + $0x18] sm:$0xff]
        %v530 = vld [vmem:[#allocation11 + $0x20] sm:$0xff]
        %v531 = vld [vmem:[#allocation11 + $0x28] sm:$0xff]
        %v532 = vld [vmem:[#allocation11 + $0x30] sm:$0xff]
        %v533 = vld [vmem:[#allocation11 + $0x38] sm:$0xff]
        %v534 = vld [vmem:[#allocation11 + $0x40] sm:$0xff]
        %v535 = vld [vmem:[#allocation11 + $0x48] sm:$0xff]
        %v536 = vld [vmem:[#allocation11 + $0x50] sm:$0xff]
        %v537 = vld [vmem:[#allocation11 + $0x58] sm:$0xff]
        %v538 = vld [vmem:[#allocation11 + $0x60] sm:$0xff]
        %v539 = vld [vmem:[#allocation11 + $0x68] sm:$0xff]
        %v540 = vld [vmem:[#allocation11 + $0x70] sm:$0xff]
        %v541 = vld [vmem:[#allocation11 + $0x78] sm:$0xff]
        %v542 = vld [vmem:[#allocation11 + $0x80] sm:$0xff]
        %v543 = vld [vmem:[#allocation11 + $0x88] sm:$0xff]
        %v544 = vld [vmem:[#allocation11 + $0x90] sm:$0xff]
        %v545 = vld [vmem:[#allocation11 + $0x98] sm:$0xff]
        %v546 = vld [vmem:[#allocation11 + $0xa0] sm:$0xff]
        %v547 = vld [vmem:[#allocation11 + $0xa8] sm:$0xff]
        %v548 = vld [vmem:[#allocation11 + $0xb0] sm:$0xff]
        %v549 = vld [vmem:[#allocation11 + $0xb8] sm:$0xff]
        %v550 = vld [vmem:[#allocation11 + $0xc0] sm:$0xff]
        %v551 = vld [vmem:[#allocation11 + $0xc8] sm:$0xff]
        %v552 = vld [vmem:[#allocation11 + $0xd0] sm:$0xff]
        %v553 = vld [vmem:[#allocation11 + $0xd8] sm:$0xff]
        %v554 = vld [vmem:[#allocation11 + $0xe0] sm:$0xff]
        %v555 = vld [vmem:[#allocation11 + $0xe8] sm:$0xff]
        %v556 = vld [vmem:[#allocation11 + $0xf0] sm:$0xff]
        %v557 = vld [vmem:[#allocation11 + $0xf8] sm:$0xff]
        %v558 = vld [vmem:[#allocation11 + $0x100] sm:$0xff]
        %v559 = vld [vmem:[#allocation11 + $0x108] sm:$0xff]
        %v560 = vld [vmem:[#allocation11 + $0x110] sm:$0xff]
        %v561 = vld [vmem:[#allocation11 + $0x118] sm:$0xff]
        %v562 = vld [vmem:[#allocation11 + $0x120] sm:$0xff]
        %v563 = vld [vmem:[#allocation11 + $0x128] sm:$0xff]
        %v564 = vld [vmem:[#allocation11 + $0x130] sm:$0xff]
        %v565 = vld [vmem:[#allocation11 + $0x138] sm:$0xff]
        %v566 = vld [vmem:[#allocation11 + $0x140] sm:$0xff]
        %v567 = vld [vmem:[#allocation11 + $0x148] sm:$0xff]
        %v568 = vld [vmem:[#allocation11 + $0x150] sm:$0xff]
        %v569 = vld [vmem:[#allocation11 + $0x158] sm:$0xff]
        %v570 = vld [vmem:[#allocation11 + $0x160] sm:$0xff]
        %v571 = vld [vmem:[#allocation11 + $0x168] sm:$0xff]
        %v572 = vld [vmem:[#allocation11 + $0x170] sm:$0xff]
        %v573 = vld [vmem:[#allocation11 + $0x178] sm:$0xff]
        %v574 = vld [vmem:[#allocation11 + $0x180] sm:$0xff]
        %v575 = vld [vmem:[#allocation11 + $0x188] sm:$0xff]
        %v576 = vld [vmem:[#allocation11 + $0x190] sm:$0xff]
        %v577 = vld [vmem:[#allocation11 + $0x198] sm:$0xff]
        %v578 = vld [vmem:[#allocation11 + $0x1a0] sm:$0xff]
        %v579 = vld [vmem:[#allocation11 + $0x1a8] sm:$0xff]
        %v580 = vld [vmem:[#allocation11 + $0x1b0] sm:$0xff]
        %v581 = vld [vmem:[#allocation11 + $0x1b8] sm:$0xff]
        %v582 = vld [vmem:[#allocation11 + $0x1c0] sm:$0xff]
        %v583 = vld [vmem:[#allocation11 + $0x1c8] sm:$0xff]
        %v584 = vld [vmem:[#allocation11 + $0x1d0] sm:$0xff]
        %v585 = vld [vmem:[#allocation11 + $0x1d8] sm:$0xff]
        %v586 = vld [vmem:[#allocation11 + $0x1e0] sm:$0xff]
        %v587 = vld [vmem:[#allocation11 + $0x1e8] sm:$0xff]
        %v588 = vld [vmem:[#allocation11 + $0x1f0] sm:$0xff]
        %v589 = vld [vmem:[#allocation11 + $0x1f8] sm:$0xff]
        %v590 = vand.u32 %v557, 4294901760
        %591 = vmatprep.subr.mxu0 %v590
        %v592 = vand.u32 %v556, 4294901760
        %593 = vmatpush1.msra.mxu0 %v592
        %v594 = vand.u32 %v555, 4294901760
        %595 = vmatprep.subr.mxu0 %v594
        %v596 = vand.u32 %v554, 4294901760
        %597 = vmatpush1.msra.mxu0 %v596
        %v598 = vand.u32 %v553, 4294901760
        %599 = vmatprep.subr.mxu0 %v598
        %v600 = vand.u32 %v552, 4294901760
        %601 = vmatpush1.msra.mxu0 %v600
        %v602 = vand.u32 %v551, 4294901760
        %603 = vmatprep.subr.mxu0 %v602
        %v604 = vand.u32 %v550, 4294901760
        %605 = vmatpush1.msra.mxu0 %v604
        %v606 = vand.u32 %v549, 4294901760
        %607 = vmatprep.subr.mxu0 %v606
        %v608 = vand.u32 %v548, 4294901760
        %609 = vmatpush1.msra.mxu0 %v608
        %v610 = vand.u32 %v547, 4294901760
        %611 = vmatprep.subr.mxu0 %v610
        %v612 = vand.u32 %v546, 4294901760
        %613 = vmatpush1.msra.mxu0 %v612
        %v614 = vand.u32 %v545, 4294901760
        %615 = vmatprep.subr.mxu0 %v614
        %v616 = vand.u32 %v544, 4294901760
        %617 = vmatpush1.msra.mxu0 %v616
        %v618 = vand.u32 %v543, 4294901760
        %619 = vmatprep.subr.mxu0 %v618
        %v620 = vand.u32 %v542, 4294901760
        %621 = vmatpush1.msra.mxu0 %v620
        %v622 = vand.u32 %v541, 4294901760
        %623 = vmatprep.subr.mxu0 %v622
        %v624 = vand.u32 %v540, 4294901760
        %625 = vmatpush1.msra.mxu0 %v624
        %v626 = vand.u32 %v539, 4294901760
        %627 = vmatprep.subr.mxu0 %v626
        %v628 = vand.u32 %v538, 4294901760
        %629 = vmatpush1.msra.mxu0 %v628
        %v630 = vand.u32 %v537, 4294901760
        %631 = vmatprep.subr.mxu0 %v630
        %v632 = vand.u32 %v536, 4294901760
        %633 = vmatpush1.msra.mxu0 %v632
        %v634 = vand.u32 %v535, 4294901760
        %635 = vmatprep.subr.mxu0 %v634
        %v636 = vand.u32 %v534, 4294901760
        %637 = vmatpush1.msra.mxu0 %v636
        %v638 = vand.u32 %v533, 4294901760
        %639 = vmatprep.subr.mxu0 %v638
        %v640 = vand.u32 %v532, 4294901760
        %641 = vmatpush1.msra.mxu0 %v640
        %v642 = vand.u32 %v531, 4294901760
        %643 = vmatprep.subr.mxu0 %v642
        %v644 = vand.u32 %v530, 4294901760
        %645 = vmatpush1.msra.mxu0 %v644
        %v646 = vand.u32 %v529, 4294901760
        %647 = vmatprep.subr.mxu0 %v646
        %v648 = vand.u32 %v528, 4294901760
        %649 = vmatpush1.msra.mxu0 %v648
        %v650 = vand.u32 %v527, 4294901760
        %651 = vmatprep.subr.mxu0 %v650
        %v652 = vand.u32 %v526, 4294901760
        %653 = vmatpush1.msra.mxu0 %v652
        %v654 = vand.u32 %v589, 4294901760
        %655 = vmatprep.subr.mxu0 %v654
        %v656 = vand.u32 %v588, 4294901760
        %657 = vmatpush2.msra.mxu0 %v656
        %v658 = vand.u32 %v587, 4294901760
        %659 = vmatprep.subr.mxu0 %v658
        %v660 = vand.u32 %v586, 4294901760
        %661 = vmatpush2.msra.mxu0 %v660
        %v662 = vand.u32 %v585, 4294901760
        %663 = vmatprep.subr.mxu0 %v662
        %v664 = vand.u32 %v584, 4294901760
        %665 = vmatpush2.msra.mxu0 %v664
        %v666 = vand.u32 %v583, 4294901760
        %667 = vmatprep.subr.mxu0 %v666
        %v668 = vand.u32 %v582, 4294901760
        %669 = vmatpush2.msra.mxu0 %v668
        %v670 = vand.u32 %v581, 4294901760
        %671 = vmatprep.subr.mxu0 %v670
        %v672 = vand.u32 %v580, 4294901760
        %673 = vmatpush2.msra.mxu0 %v672
        %v674 = vand.u32 %v579, 4294901760
        %675 = vmatprep.subr.mxu0 %v674
        %v676 = vand.u32 %v578, 4294901760
        %677 = vmatpush2.msra.mxu0 %v676
        %v678 = vand.u32 %v577, 4294901760
        %679 = vmatprep.subr.mxu0 %v678
        %v680 = vand.u32 %v576, 4294901760
        %681 = vmatpush2.msra.mxu0 %v680
        %v682 = vand.u32 %v575, 4294901760
        %683 = vmatprep.subr.mxu0 %v682
        %v684 = vand.u32 %v574, 4294901760
        %685 = vmatpush2.msra.mxu0 %v684
        %v686 = vand.u32 %v573, 4294901760
        %687 = vmatprep.subr.mxu0 %v686
        %v688 = vand.u32 %v572, 4294901760
        %689 = vmatpush2.msra.mxu0 %v688
        %v690 = vand.u32 %v571, 4294901760
        %691 = vmatprep.subr.mxu0 %v690
        %v692 = vand.u32 %v570, 4294901760
        %693 = vmatpush2.msra.mxu0 %v692
        %v694 = vand.u32 %v569, 4294901760
        %695 = vmatprep.subr.mxu0 %v694
        %v696 = vand.u32 %v568, 4294901760
        %697 = vmatpush2.msra.mxu0 %v696
        %v698 = vand.u32 %v567, 4294901760
        %699 = vmatprep.subr.mxu0 %v698
        %v700 = vand.u32 %v566, 4294901760
        %701 = vmatpush2.msra.mxu0 %v700
        %v702 = vand.u32 %v565, 4294901760
        %703 = vmatprep.subr.mxu0 %v702
        %v704 = vand.u32 %v564, 4294901760
        %705 = vmatpush2.msra.mxu0 %v704
        %v706 = vand.u32 %v563, 4294901760
        %707 = vmatprep.subr.mxu0 %v706
        %v708 = vand.u32 %v562, 4294901760
        %709 = vmatpush2.msra.mxu0 %v708
        %v710 = vand.u32 %v561, 4294901760
        %711 = vmatprep.subr.mxu0 %v710
        %v712 = vand.u32 %v560, 4294901760
        %713 = vmatpush2.msra.mxu0 %v712
        %v714 = vand.u32 %v559, 4294901760
        %715 = vmatprep.subr.mxu0 %v714
        %v716 = vand.u32 %v558, 4294901760
        %717 = vmatpush2.msra.mxu0 %v716
        %v718 = vand.u32 %v525, 4294901760
        %v719 = vsub.f32 %v525, %v718
        %v720 = vand.u32 %v719, 4294901760
        %v721 = vsub.f32 %v719, %v720
        %v722 = vand.u32 %v721, 4294901760
        %723 = vmatprep.mubr.f32.mxu0 %v722
        %v724 = vand.u32 %v520, 4294901760
        %v725 = vsub.f32 %v520, %v724
        %v726 = vand.u32 %v725, 4294901760
        %v727 = vsub.f32 %v725, %v726
        %v728 = vand.u32 %v727, 4294901760
        %729 = vmatmul.mubr.f32.gmra.mxu0 %v728
        %v730 = vpop.f32.mrf.mxu0
        %v731 = vadd.f32 0.0, %v730
        %v732 = vpop.f32.mrf.mxu0
        %v733 = vadd.f32 0.0, %v732
        %734 = vdwg.mxu0
        %v735 = vand.u32 %v557, 4294901760
        %v736 = vsub.f32 %v557, %v735
        %v737 = vand.u32 %v736, 4294901760
        %v738 = vsub.f32 %v736, %v737
        %v739 = vand.u32 %v738, 4294901760
        %740 = vmatprep.subr.mxu0 %v739
        %v741 = vand.u32 %v556, 4294901760
        %v742 = vsub.f32 %v556, %v741
        %v743 = vand.u32 %v742, 4294901760
        %v744 = vsub.f32 %v742, %v743
        %v745 = vand.u32 %v744, 4294901760
        %746 = vmatpush1.msra.mxu0 %v745
        %v747 = vand.u32 %v555, 4294901760
        %v748 = vsub.f32 %v555, %v747
        %v749 = vand.u32 %v748, 4294901760
        %v750 = vsub.f32 %v748, %v749
        %v751 = vand.u32 %v750, 4294901760
        %752 = vmatprep.subr.mxu0 %v751
        %v753 = vand.u32 %v554, 4294901760
        %v754 = vsub.f32 %v554, %v753
        %v755 = vand.u32 %v754, 4294901760
        %v756 = vsub.f32 %v754, %v755
        %v757 = vand.u32 %v756, 4294901760
        %758 = vmatpush1.msra.mxu0 %v757
        %v759 = vand.u32 %v553, 4294901760
        %v760 = vsub.f32 %v553, %v759
        %v761 = vand.u32 %v760, 4294901760
        %v762 = vsub.f32 %v760, %v761
        %v763 = vand.u32 %v762, 4294901760
        %764 = vmatprep.subr.mxu0 %v763
        %v765 = vand.u32 %v552, 4294901760
        %v766 = vsub.f32 %v552, %v765
        %v767 = vand.u32 %v766, 4294901760
        %v768 = vsub.f32 %v766, %v767
        %v769 = vand.u32 %v768, 4294901760
        %770 = vmatpush1.msra.mxu0 %v769
        %v771 = vand.u32 %v551, 4294901760
        %v772 = vsub.f32 %v551, %v771
        %v773 = vand.u32 %v772, 4294901760
        %v774 = vsub.f32 %v772, %v773
        %v775 = vand.u32 %v774, 4294901760
        %776 = vmatprep.subr.mxu0 %v775
        %v777 = vand.u32 %v550, 4294901760
        %v778 = vsub.f32 %v550, %v777
        %v779 = vand.u32 %v778, 4294901760
        %v780 = vsub.f32 %v778, %v779
        %v781 = vand.u32 %v780, 4294901760
        %782 = vmatpush1.msra.mxu0 %v781
        %v783 = vand.u32 %v549, 4294901760
        %v784 = vsub.f32 %v549, %v783
        %v785 = vand.u32 %v784, 4294901760
        %v786 = vsub.f32 %v784, %v785
        %v787 = vand.u32 %v786, 4294901760
        %788 = vmatprep.subr.mxu0 %v787
        %v789 = vand.u32 %v548, 4294901760
        %v790 = vsub.f32 %v548, %v789
        %v791 = vand.u32 %v790, 4294901760
        %v792 = vsub.f32 %v790, %v791
        %v793 = vand.u32 %v792, 4294901760
        %794 = vmatpush1.msra.mxu0 %v793
        %v795 = vand.u32 %v547, 4294901760
        %v796 = vsub.f32 %v547, %v795
        %v797 = vand.u32 %v796, 4294901760
        %v798 = vsub.f32 %v796, %v797
        %v799 = vand.u32 %v798, 4294901760
        %800 = vmatprep.subr.mxu0 %v799
        %v801 = vand.u32 %v546, 4294901760
        %v802 = vsub.f32 %v546, %v801
        %v803 = vand.u32 %v802, 4294901760
        %v804 = vsub.f32 %v802, %v803
        %v805 = vand.u32 %v804, 4294901760
        %806 = vmatpush1.msra.mxu0 %v805
        %v807 = vand.u32 %v545, 4294901760
        %v808 = vsub.f32 %v545, %v807
        %v809 = vand.u32 %v808, 4294901760
        %v810 = vsub.f32 %v808, %v809
        %v811 = vand.u32 %v810, 4294901760
        %812 = vmatprep.subr.mxu0 %v811
        %v813 = vand.u32 %v544, 4294901760
        %v814 = vsub.f32 %v544, %v813
        %v815 = vand.u32 %v814, 4294901760
        %v816 = vsub.f32 %v814, %v815
        %v817 = vand.u32 %v816, 4294901760
        %818 = vmatpush1.msra.mxu0 %v817
        %v819 = vand.u32 %v543, 4294901760
        %v820 = vsub.f32 %v543, %v819
        %v821 = vand.u32 %v820, 4294901760
        %v822 = vsub.f32 %v820, %v821
        %v823 = vand.u32 %v822, 4294901760
        %824 = vmatprep.subr.mxu0 %v823
        %v825 = vand.u32 %v542, 4294901760
        %v826 = vsub.f32 %v542, %v825
        %v827 = vand.u32 %v826, 4294901760
        %v828 = vsub.f32 %v826, %v827
        %v829 = vand.u32 %v828, 4294901760
        %830 = vmatpush1.msra.mxu0 %v829
        %v831 = vand.u32 %v541, 4294901760
        %v832 = vsub.f32 %v541, %v831
        %v833 = vand.u32 %v832, 4294901760
        %v834 = vsub.f32 %v832, %v833
        %v835 = vand.u32 %v834, 4294901760
        %836 = vmatprep.subr.mxu0 %v835
        %v837 = vand.u32 %v540, 4294901760
        %v838 = vsub.f32 %v540, %v837
        %v839 = vand.u32 %v838, 4294901760
        %v840 = vsub.f32 %v838, %v839
        %v841 = vand.u32 %v840, 4294901760
        %842 = vmatpush1.msra.mxu0 %v841
        %v843 = vand.u32 %v539, 4294901760
        %v844 = vsub.f32 %v539, %v843
        %v845 = vand.u32 %v844, 4294901760
        %v846 = vsub.f32 %v844, %v845
        %v847 = vand.u32 %v846, 4294901760
        %848 = vmatprep.subr.mxu0 %v847
        %v849 = vand.u32 %v538, 4294901760
        %v850 = vsub.f32 %v538, %v849
        %v851 = vand.u32 %v850, 4294901760
        %v852 = vsub.f32 %v850, %v851
        %v853 = vand.u32 %v852, 4294901760
        %854 = vmatpush1.msra.mxu0 %v853
        %v855 = vand.u32 %v537, 4294901760
        %v856 = vsub.f32 %v537, %v855
        %v857 = vand.u32 %v856, 4294901760
        %v858 = vsub.f32 %v856, %v857
        %v859 = vand.u32 %v858, 4294901760
        %860 = vmatprep.subr.mxu0 %v859
        %v861 = vand.u32 %v536, 4294901760
        %v862 = vsub.f32 %v536, %v861
        %v863 = vand.u32 %v862, 4294901760
        %v864 = vsub.f32 %v862, %v863
        %v865 = vand.u32 %v864, 4294901760
        %866 = vmatpush1.msra.mxu0 %v865
        %v867 = vand.u32 %v535, 4294901760
        %v868 = vsub.f32 %v535, %v867
        %v869 = vand.u32 %v868, 4294901760
        %v870 = vsub.f32 %v868, %v869
        %v871 = vand.u32 %v870, 4294901760
        %872 = vmatprep.subr.mxu0 %v871
        %v873 = vand.u32 %v534, 4294901760
        %v874 = vsub.f32 %v534, %v873
        %v875 = vand.u32 %v874, 4294901760
        %v876 = vsub.f32 %v874, %v875
        %v877 = vand.u32 %v876, 4294901760
        %878 = vmatpush1.msra.mxu0 %v877
        %v879 = vand.u32 %v533, 4294901760
        %v880 = vsub.f32 %v533, %v879
        %v881 = vand.u32 %v880, 4294901760
        %v882 = vsub.f32 %v880, %v881
        %v883 = vand.u32 %v882, 4294901760
        %884 = vmatprep.subr.mxu0 %v883
        %v885 = vand.u32 %v532, 4294901760
        %v886 = vsub.f32 %v532, %v885
        %v887 = vand.u32 %v886, 4294901760
        %v888 = vsub.f32 %v886, %v887
        %v889 = vand.u32 %v888, 4294901760
        %890 = vmatpush1.msra.mxu0 %v889
        %v891 = vand.u32 %v531, 4294901760
        %v892 = vsub.f32 %v531, %v891
        %v893 = vand.u32 %v892, 4294901760
        %v894 = vsub.f32 %v892, %v893
        %v895 = vand.u32 %v894, 4294901760
        %896 = vmatprep.subr.mxu0 %v895
        %v897 = vand.u32 %v530, 4294901760
        %v898 = vsub.f32 %v530, %v897
        %v899 = vand.u32 %v898, 4294901760
        %v900 = vsub.f32 %v898, %v899
        %v901 = vand.u32 %v900, 4294901760
        %902 = vmatpush1.msra.mxu0 %v901
        %v903 = vand.u32 %v529, 4294901760
        %v904 = vsub.f32 %v529, %v903
        %v905 = vand.u32 %v904, 4294901760
        %v906 = vsub.f32 %v904, %v905
        %v907 = vand.u32 %v906, 4294901760
        %908 = vmatprep.subr.mxu0 %v907
        %v909 = vand.u32 %v528, 4294901760
        %v910 = vsub.f32 %v528, %v909
        %v911 = vand.u32 %v910, 4294901760
        %v912 = vsub.f32 %v910, %v911
        %v913 = vand.u32 %v912, 4294901760
        %914 = vmatpush1.msra.mxu0 %v913
        %v915 = vand.u32 %v527, 4294901760
        %v916 = vsub.f32 %v527, %v915
        %v917 = vand.u32 %v916, 4294901760
        %v918 = vsub.f32 %v916, %v917
        %v919 = vand.u32 %v918, 4294901760
        %920 = vmatprep.subr.mxu0 %v919
        %v921 = vand.u32 %v526, 4294901760
        %v922 = vsub.f32 %v526, %v921
        %v923 = vand.u32 %v922, 4294901760
        %v924 = vsub.f32 %v922, %v923
        %v925 = vand.u32 %v924, 4294901760
        %926 = vmatpush1.msra.mxu0 %v925
        %v927 = vand.u32 %v589, 4294901760
        %v928 = vsub.f32 %v589, %v927
        %v929 = vand.u32 %v928, 4294901760
        %v930 = vsub.f32 %v928, %v929
        %v931 = vand.u32 %v930, 4294901760
        %932 = vmatprep.subr.mxu0 %v931
        %v933 = vand.u32 %v588, 4294901760
        %v934 = vsub.f32 %v588, %v933
        %v935 = vand.u32 %v934, 4294901760
        %v936 = vsub.f32 %v934, %v935
        %v937 = vand.u32 %v936, 4294901760
        %938 = vmatpush2.msra.mxu0 %v937
        %v939 = vand.u32 %v587, 4294901760
        %v940 = vsub.f32 %v587, %v939
        %v941 = vand.u32 %v940, 4294901760
        %v942 = vsub.f32 %v940, %v941
        %v943 = vand.u32 %v942, 4294901760
        %944 = vmatprep.subr.mxu0 %v943
        %v945 = vand.u32 %v586, 4294901760
        %v946 = vsub.f32 %v586, %v945
        %v947 = vand.u32 %v946, 4294901760
        %v948 = vsub.f32 %v946, %v947
        %v949 = vand.u32 %v948, 4294901760
        %950 = vmatpush2.msra.mxu0 %v949
        %v951 = vand.u32 %v585, 4294901760
        %v952 = vsub.f32 %v585, %v951
        %v953 = vand.u32 %v952, 4294901760
        %v954 = vsub.f32 %v952, %v953
        %v955 = vand.u32 %v954, 4294901760
        %956 = vmatprep.subr.mxu0 %v955
        %v957 = vand.u32 %v584, 4294901760
        %v958 = vsub.f32 %v584, %v957
        %v959 = vand.u32 %v958, 4294901760
        %v960 = vsub.f32 %v958, %v959
        %v961 = vand.u32 %v960, 4294901760
        %962 = vmatpush2.msra.mxu0 %v961
        %v963 = vand.u32 %v583, 4294901760
        %v964 = vsub.f32 %v583, %v963
        %v965 = vand.u32 %v964, 4294901760
        %v966 = vsub.f32 %v964, %v965
        %v967 = vand.u32 %v966, 4294901760
        %968 = vmatprep.subr.mxu0 %v967
        %v969 = vand.u32 %v582, 4294901760
        %v970 = vsub.f32 %v582, %v969
        %v971 = vand.u32 %v970, 4294901760
        %v972 = vsub.f32 %v970, %v971
        %v973 = vand.u32 %v972, 4294901760
        %974 = vmatpush2.msra.mxu0 %v973
        %v975 = vand.u32 %v581, 4294901760
        %v976 = vsub.f32 %v581, %v975
        %v977 = vand.u32 %v976, 4294901760
        %v978 = vsub.f32 %v976, %v977
        %v979 = vand.u32 %v978, 4294901760
        %980 = vmatprep.subr.mxu0 %v979
        %v981 = vand.u32 %v580, 4294901760
        %v982 = vsub.f32 %v580, %v981
        %v983 = vand.u32 %v982, 4294901760
        %v984 = vsub.f32 %v982, %v983
        %v985 = vand.u32 %v984, 4294901760
        %986 = vmatpush2.msra.mxu0 %v985
        %v987 = vand.u32 %v579, 4294901760
        %v988 = vsub.f32 %v579, %v987
        %v989 = vand.u32 %v988, 4294901760
        %v990 = vsub.f32 %v988, %v989
        %v991 = vand.u32 %v990, 4294901760
        %992 = vmatprep.subr.mxu0 %v991
        %v993 = vand.u32 %v578, 4294901760
        %v994 = vsub.f32 %v578, %v993
        %v995 = vand.u32 %v994, 4294901760
        %v996 = vsub.f32 %v994, %v995
        %v997 = vand.u32 %v996, 4294901760
        %998 = vmatpush2.msra.mxu0 %v997
        %v999 = vand.u32 %v577, 4294901760
        %v1000 = vsub.f32 %v577, %v999
        %v1001 = vand.u32 %v1000, 4294901760
        %v1002 = vsub.f32 %v1000, %v1001
        %v1003 = vand.u32 %v1002, 4294901760
        %1004 = vmatprep.subr.mxu0 %v1003
        %v1005 = vand.u32 %v576, 4294901760
        %v1006 = vsub.f32 %v576, %v1005
        %v1007 = vand.u32 %v1006, 4294901760
        %v1008 = vsub.f32 %v1006, %v1007
        %v1009 = vand.u32 %v1008, 4294901760
        %1010 = vmatpush2.msra.mxu0 %v1009
        %v1011 = vand.u32 %v575, 4294901760
        %v1012 = vsub.f32 %v575, %v1011
        %v1013 = vand.u32 %v1012, 4294901760
        %v1014 = vsub.f32 %v1012, %v1013
        %v1015 = vand.u32 %v1014, 4294901760
        %1016 = vmatprep.subr.mxu0 %v1015
        %v1017 = vand.u32 %v574, 4294901760
        %v1018 = vsub.f32 %v574, %v1017
        %v1019 = vand.u32 %v1018, 4294901760
        %v1020 = vsub.f32 %v1018, %v1019
        %v1021 = vand.u32 %v1020, 4294901760
        %1022 = vmatpush2.msra.mxu0 %v1021
        %v1023 = vand.u32 %v573, 4294901760
        %v1024 = vsub.f32 %v573, %v1023
        %v1025 = vand.u32 %v1024, 4294901760
        %v1026 = vsub.f32 %v1024, %v1025
        %v1027 = vand.u32 %v1026, 4294901760
        %1028 = vmatprep.subr.mxu0 %v1027
        %v1029 = vand.u32 %v572, 4294901760
        %v1030 = vsub.f32 %v572, %v1029
        %v1031 = vand.u32 %v1030, 4294901760
        %v1032 = vsub.f32 %v1030, %v1031
        %v1033 = vand.u32 %v1032, 4294901760
        %1034 = vmatpush2.msra.mxu0 %v1033
        %v1035 = vand.u32 %v571, 4294901760
        %v1036 = vsub.f32 %v571, %v1035
        %v1037 = vand.u32 %v1036, 4294901760
        %v1038 = vsub.f32 %v1036, %v1037
        %v1039 = vand.u32 %v1038, 4294901760
        %1040 = vmatprep.subr.mxu0 %v1039
        %v1041 = vand.u32 %v570, 4294901760
        %v1042 = vsub.f32 %v570, %v1041
        %v1043 = vand.u32 %v1042, 4294901760
        %v1044 = vsub.f32 %v1042, %v1043
        %v1045 = vand.u32 %v1044, 4294901760
        %1046 = vmatpush2.msra.mxu0 %v1045
        %v1047 = vand.u32 %v569, 4294901760
        %v1048 = vsub.f32 %v569, %v1047
        %v1049 = vand.u32 %v1048, 4294901760
        %v1050 = vsub.f32 %v1048, %v1049
        %v1051 = vand.u32 %v1050, 4294901760
        %1052 = vmatprep.subr.mxu0 %v1051
        %v1053 = vand.u32 %v568, 4294901760
        %v1054 = vsub.f32 %v568, %v1053
        %v1055 = vand.u32 %v1054, 4294901760
        %v1056 = vsub.f32 %v1054, %v1055
        %v1057 = vand.u32 %v1056, 4294901760
        %1058 = vmatpush2.msra.mxu0 %v1057
        %v1059 = vand.u32 %v567, 4294901760
        %v1060 = vsub.f32 %v567, %v1059
        %v1061 = vand.u32 %v1060, 4294901760
        %v1062 = vsub.f32 %v1060, %v1061
        %v1063 = vand.u32 %v1062, 4294901760
        %1064 = vmatprep.subr.mxu0 %v1063
        %v1065 = vand.u32 %v566, 4294901760
        %v1066 = vsub.f32 %v566, %v1065
        %v1067 = vand.u32 %v1066, 4294901760
        %v1068 = vsub.f32 %v1066, %v1067
        %v1069 = vand.u32 %v1068, 4294901760
        %1070 = vmatpush2.msra.mxu0 %v1069
        %v1071 = vand.u32 %v565, 4294901760
        %v1072 = vsub.f32 %v565, %v1071
        %v1073 = vand.u32 %v1072, 4294901760
        %v1074 = vsub.f32 %v1072, %v1073
        %v1075 = vand.u32 %v1074, 4294901760
        %1076 = vmatprep.subr.mxu0 %v1075
        %v1077 = vand.u32 %v564, 4294901760
        %v1078 = vsub.f32 %v564, %v1077
        %v1079 = vand.u32 %v1078, 4294901760
        %v1080 = vsub.f32 %v1078, %v1079
        %v1081 = vand.u32 %v1080, 4294901760
        %1082 = vmatpush2.msra.mxu0 %v1081
        %v1083 = vand.u32 %v563, 4294901760
        %v1084 = vsub.f32 %v563, %v1083
        %v1085 = vand.u32 %v1084, 4294901760
        %v1086 = vsub.f32 %v1084, %v1085
        %v1087 = vand.u32 %v1086, 4294901760
        %1088 = vmatprep.subr.mxu0 %v1087
        %v1089 = vand.u32 %v562, 4294901760
        %v1090 = vsub.f32 %v562, %v1089
        %v1091 = vand.u32 %v1090, 4294901760
        %v1092 = vsub.f32 %v1090, %v1091
        %v1093 = vand.u32 %v1092, 4294901760
        %1094 = vmatpush2.msra.mxu0 %v1093
        %v1095 = vand.u32 %v561, 4294901760
        %v1096 = vsub.f32 %v561, %v1095
        %v1097 = vand.u32 %v1096, 4294901760
        %v1098 = vsub.f32 %v1096, %v1097
        %v1099 = vand.u32 %v1098, 4294901760
        %1100 = vmatprep.subr.mxu0 %v1099
        %v1101 = vand.u32 %v560, 4294901760
        %v1102 = vsub.f32 %v560, %v1101
        %v1103 = vand.u32 %v1102, 4294901760
        %v1104 = vsub.f32 %v1102, %v1103
        %v1105 = vand.u32 %v1104, 4294901760
        %1106 = vmatpush2.msra.mxu0 %v1105
        %v1107 = vand.u32 %v559, 4294901760
        %v1108 = vsub.f32 %v559, %v1107
        %v1109 = vand.u32 %v1108, 4294901760
        %v1110 = vsub.f32 %v1108, %v1109
        %v1111 = vand.u32 %v1110, 4294901760
        %1112 = vmatprep.subr.mxu0 %v1111
        %v1113 = vand.u32 %v558, 4294901760
        %v1114 = vsub.f32 %v558, %v1113
        %v1115 = vand.u32 %v1114, 4294901760
        %v1116 = vsub.f32 %v1114, %v1115
        %v1117 = vand.u32 %v1116, 4294901760
        %1118 = vmatpush2.msra.mxu0 %v1117
        %v1119 = vand.u32 %v525, 4294901760
        %1120 = vmatprep.mubr.f32.mxu0 %v1119
        %v1121 = vand.u32 %v520, 4294901760
        %1122 = vmatmul.mubr.f32.gmra.mxu0 %v1121
        %v1123 = vpop.f32.mrf.mxu0
        %v1124 = vadd.f32 %v731, %v1123
        %v1125 = vpop.f32.mrf.mxu0
        %v1126 = vadd.f32 %v733, %v1125
        %1127 = vdwg.mxu0
        %v1128 = vand.u32 %v557, 4294901760
        %v1129 = vsub.f32 %v557, %v1128
        %1130 = vmatprep.subr.mxu0 %v1129
        %v1131 = vand.u32 %v556, 4294901760
        %v1132 = vsub.f32 %v556, %v1131
        %1133 = vmatpush1.msra.mxu0 %v1132
        %v1134 = vand.u32 %v555, 4294901760
        %v1135 = vsub.f32 %v555, %v1134
        %1136 = vmatprep.subr.mxu0 %v1135
        %v1137 = vand.u32 %v554, 4294901760
        %v1138 = vsub.f32 %v554, %v1137
        %1139 = vmatpush1.msra.mxu0 %v1138
        %v1140 = vand.u32 %v553, 4294901760
        %v1141 = vsub.f32 %v553, %v1140
        %1142 = vmatprep.subr.mxu0 %v1141
        %v1143 = vand.u32 %v552, 4294901760
        %v1144 = vsub.f32 %v552, %v1143
        %1145 = vmatpush1.msra.mxu0 %v1144
        %v1146 = vand.u32 %v551, 4294901760
        %v1147 = vsub.f32 %v551, %v1146
        %1148 = vmatprep.subr.mxu0 %v1147
        %v1149 = vand.u32 %v550, 4294901760
        %v1150 = vsub.f32 %v550, %v1149
        %1151 = vmatpush1.msra.mxu0 %v1150
        %v1152 = vand.u32 %v549, 4294901760
        %v1153 = vsub.f32 %v549, %v1152
        %1154 = vmatprep.subr.mxu0 %v1153
        %v1155 = vand.u32 %v548, 4294901760
        %v1156 = vsub.f32 %v548, %v1155
        %1157 = vmatpush1.msra.mxu0 %v1156
        %v1158 = vand.u32 %v547, 4294901760
        %v1159 = vsub.f32 %v547, %v1158
        %1160 = vmatprep.subr.mxu0 %v1159
        %v1161 = vand.u32 %v546, 4294901760
        %v1162 = vsub.f32 %v546, %v1161
        %1163 = vmatpush1.msra.mxu0 %v1162
        %v1164 = vand.u32 %v545, 4294901760
        %v1165 = vsub.f32 %v545, %v1164
        %1166 = vmatprep.subr.mxu0 %v1165
        %v1167 = vand.u32 %v544, 4294901760
        %v1168 = vsub.f32 %v544, %v1167
        %1169 = vmatpush1.msra.mxu0 %v1168
        %v1170 = vand.u32 %v543, 4294901760
        %v1171 = vsub.f32 %v543, %v1170
        %1172 = vmatprep.subr.mxu0 %v1171
        %v1173 = vand.u32 %v542, 4294901760
        %v1174 = vsub.f32 %v542, %v1173
        %1175 = vmatpush1.msra.mxu0 %v1174
        %v1176 = vand.u32 %v541, 4294901760
        %v1177 = vsub.f32 %v541, %v1176
        %1178 = vmatprep.subr.mxu0 %v1177
        %v1179 = vand.u32 %v540, 4294901760
        %v1180 = vsub.f32 %v540, %v1179
        %1181 = vmatpush1.msra.mxu0 %v1180
        %v1182 = vand.u32 %v539, 4294901760
        %v1183 = vsub.f32 %v539, %v1182
        %1184 = vmatprep.subr.mxu0 %v1183
        %v1185 = vand.u32 %v538, 4294901760
        %v1186 = vsub.f32 %v538, %v1185
        %1187 = vmatpush1.msra.mxu0 %v1186
        %v1188 = vand.u32 %v537, 4294901760
        %v1189 = vsub.f32 %v537, %v1188
        %1190 = vmatprep.subr.mxu0 %v1189
        %v1191 = vand.u32 %v536, 4294901760
        %v1192 = vsub.f32 %v536, %v1191
        %1193 = vmatpush1.msra.mxu0 %v1192
        %v1194 = vand.u32 %v535, 4294901760
        %v1195 = vsub.f32 %v535, %v1194
        %1196 = vmatprep.subr.mxu0 %v1195
        %v1197 = vand.u32 %v534, 4294901760
        %v1198 = vsub.f32 %v534, %v1197
        %1199 = vmatpush1.msra.mxu0 %v1198
        %v1200 = vand.u32 %v533, 4294901760
        %v1201 = vsub.f32 %v533, %v1200
        %1202 = vmatprep.subr.mxu0 %v1201
        %v1203 = vand.u32 %v532, 4294901760
        %v1204 = vsub.f32 %v532, %v1203
        %1205 = vmatpush1.msra.mxu0 %v1204
        %v1206 = vand.u32 %v531, 4294901760
        %v1207 = vsub.f32 %v531, %v1206
        %1208 = vmatprep.subr.mxu0 %v1207
        %v1209 = vand.u32 %v530, 4294901760
        %v1210 = vsub.f32 %v530, %v1209
        %1211 = vmatpush1.msra.mxu0 %v1210
        %v1212 = vand.u32 %v529, 4294901760
        %v1213 = vsub.f32 %v529, %v1212
        %1214 = vmatprep.subr.mxu0 %v1213
        %v1215 = vand.u32 %v528, 4294901760
        %v1216 = vsub.f32 %v528, %v1215
        %1217 = vmatpush1.msra.mxu0 %v1216
        %v1218 = vand.u32 %v527, 4294901760
        %v1219 = vsub.f32 %v527, %v1218
        %1220 = vmatprep.subr.mxu0 %v1219
        %v1221 = vand.u32 %v526, 4294901760
        %v1222 = vsub.f32 %v526, %v1221
        %1223 = vmatpush1.msra.mxu0 %v1222
        %v1224 = vand.u32 %v589, 4294901760
        %v1225 = vsub.f32 %v589, %v1224
        %1226 = vmatprep.subr.mxu0 %v1225
        %v1227 = vand.u32 %v588, 4294901760
        %v1228 = vsub.f32 %v588, %v1227
        %1229 = vmatpush2.msra.mxu0 %v1228
        %v1230 = vand.u32 %v587, 4294901760
        %v1231 = vsub.f32 %v587, %v1230
        %1232 = vmatprep.subr.mxu0 %v1231
        %v1233 = vand.u32 %v586, 4294901760
        %v1234 = vsub.f32 %v586, %v1233
        %1235 = vmatpush2.msra.mxu0 %v1234
        %v1236 = vand.u32 %v585, 4294901760
        %v1237 = vsub.f32 %v585, %v1236
        %1238 = vmatprep.subr.mxu0 %v1237
        %v1239 = vand.u32 %v584, 4294901760
        %v1240 = vsub.f32 %v584, %v1239
        %1241 = vmatpush2.msra.mxu0 %v1240
        %v1242 = vand.u32 %v583, 4294901760
        %v1243 = vsub.f32 %v583, %v1242
        %1244 = vmatprep.subr.mxu0 %v1243
        %v1245 = vand.u32 %v582, 4294901760
        %v1246 = vsub.f32 %v582, %v1245
        %1247 = vmatpush2.msra.mxu0 %v1246
        %v1248 = vand.u32 %v581, 4294901760
        %v1249 = vsub.f32 %v581, %v1248
        %1250 = vmatprep.subr.mxu0 %v1249
        %v1251 = vand.u32 %v580, 4294901760
        %v1252 = vsub.f32 %v580, %v1251
        %1253 = vmatpush2.msra.mxu0 %v1252
        %v1254 = vand.u32 %v579, 4294901760
        %v1255 = vsub.f32 %v579, %v1254
        %1256 = vmatprep.subr.mxu0 %v1255
        %v1257 = vand.u32 %v578, 4294901760
        %v1258 = vsub.f32 %v578, %v1257
        %1259 = vmatpush2.msra.mxu0 %v1258
        %v1260 = vand.u32 %v577, 4294901760
        %v1261 = vsub.f32 %v577, %v1260
        %1262 = vmatprep.subr.mxu0 %v1261
        %v1263 = vand.u32 %v576, 4294901760
        %v1264 = vsub.f32 %v576, %v1263
        %1265 = vmatpush2.msra.mxu0 %v1264
        %v1266 = vand.u32 %v575, 4294901760
        %v1267 = vsub.f32 %v575, %v1266
        %1268 = vmatprep.subr.mxu0 %v1267
        %v1269 = vand.u32 %v574, 4294901760
        %v1270 = vsub.f32 %v574, %v1269
        %1271 = vmatpush2.msra.mxu0 %v1270
        %v1272 = vand.u32 %v573, 4294901760
        %v1273 = vsub.f32 %v573, %v1272
        %1274 = vmatprep.subr.mxu0 %v1273
        %v1275 = vand.u32 %v572, 4294901760
        %v1276 = vsub.f32 %v572, %v1275
        %1277 = vmatpush2.msra.mxu0 %v1276
        %v1278 = vand.u32 %v571, 4294901760
        %v1279 = vsub.f32 %v571, %v1278
        %1280 = vmatprep.subr.mxu0 %v1279
        %v1281 = vand.u32 %v570, 4294901760
        %v1282 = vsub.f32 %v570, %v1281
        %1283 = vmatpush2.msra.mxu0 %v1282
        %v1284 = vand.u32 %v569, 4294901760
        %v1285 = vsub.f32 %v569, %v1284
        %1286 = vmatprep.subr.mxu0 %v1285
        %v1287 = vand.u32 %v568, 4294901760
        %v1288 = vsub.f32 %v568, %v1287
        %1289 = vmatpush2.msra.mxu0 %v1288
        %v1290 = vand.u32 %v567, 4294901760
        %v1291 = vsub.f32 %v567, %v1290
        %1292 = vmatprep.subr.mxu0 %v1291
        %v1293 = vand.u32 %v566, 4294901760
        %v1294 = vsub.f32 %v566, %v1293
        %1295 = vmatpush2.msra.mxu0 %v1294
        %v1296 = vand.u32 %v565, 4294901760
        %v1297 = vsub.f32 %v565, %v1296
        %1298 = vmatprep.subr.mxu0 %v1297
        %v1299 = vand.u32 %v564, 4294901760
        %v1300 = vsub.f32 %v564, %v1299
        %1301 = vmatpush2.msra.mxu0 %v1300
        %v1302 = vand.u32 %v563, 4294901760
        %v1303 = vsub.f32 %v563, %v1302
        %1304 = vmatprep.subr.mxu0 %v1303
        %v1305 = vand.u32 %v562, 4294901760
        %v1306 = vsub.f32 %v562, %v1305
        %1307 = vmatpush2.msra.mxu0 %v1306
        %v1308 = vand.u32 %v561, 4294901760
        %v1309 = vsub.f32 %v561, %v1308
        %1310 = vmatprep.subr.mxu0 %v1309
        %v1311 = vand.u32 %v560, 4294901760
        %v1312 = vsub.f32 %v560, %v1311
        %1313 = vmatpush2.msra.mxu0 %v1312
        %v1314 = vand.u32 %v559, 4294901760
        %v1315 = vsub.f32 %v559, %v1314
        %1316 = vmatprep.subr.mxu0 %v1315
        %v1317 = vand.u32 %v558, 4294901760
        %v1318 = vsub.f32 %v558, %v1317
        %1319 = vmatpush2.msra.mxu0 %v1318
        %v1320 = vand.u32 %v525, 4294901760
        %v1321 = vsub.f32 %v525, %v1320
        %1322 = vmatprep.mubr.f32.mxu0 %v1321
        %v1323 = vand.u32 %v520, 4294901760
        %v1324 = vsub.f32 %v520, %v1323
        %1325 = vmatmul.mubr.f32.gmra.mxu0 %v1324
        %v1326 = vpop.f32.mrf.mxu0
        %v1327 = vadd.f32 %v1124, %v1326
        %v1328 = vpop.f32.mrf.mxu0
        %v1329 = vadd.f32 %v1126, %v1328
        %1330 = vdwg.mxu0
        %v1331 = vand.u32 %v557, 4294901760
        %1332 = vmatprep.subr.mxu0 %v1331
        %v1333 = vand.u32 %v556, 4294901760
        %1334 = vmatpush1.msra.mxu0 %v1333
        %v1335 = vand.u32 %v555, 4294901760
        %1336 = vmatprep.subr.mxu0 %v1335
        %v1337 = vand.u32 %v554, 4294901760
        %1338 = vmatpush1.msra.mxu0 %v1337
        %v1339 = vand.u32 %v553, 4294901760
        %1340 = vmatprep.subr.mxu0 %v1339
        %v1341 = vand.u32 %v552, 4294901760
        %1342 = vmatpush1.msra.mxu0 %v1341
        %v1343 = vand.u32 %v551, 4294901760
        %1344 = vmatprep.subr.mxu0 %v1343
        %v1345 = vand.u32 %v550, 4294901760
        %1346 = vmatpush1.msra.mxu0 %v1345
        %v1347 = vand.u32 %v549, 4294901760
        %1348 = vmatprep.subr.mxu0 %v1347
        %v1349 = vand.u32 %v548, 4294901760
        %1350 = vmatpush1.msra.mxu0 %v1349
        %v1351 = vand.u32 %v547, 4294901760
        %1352 = vmatprep.subr.mxu0 %v1351
        %v1353 = vand.u32 %v546, 4294901760
        %1354 = vmatpush1.msra.mxu0 %v1353
        %v1355 = vand.u32 %v545, 4294901760
        %1356 = vmatprep.subr.mxu0 %v1355
        %v1357 = vand.u32 %v544, 4294901760
        %1358 = vmatpush1.msra.mxu0 %v1357
        %v1359 = vand.u32 %v543, 4294901760
        %1360 = vmatprep.subr.mxu0 %v1359
        %v1361 = vand.u32 %v542, 4294901760
        %1362 = vmatpush1.msra.mxu0 %v1361
        %v1363 = vand.u32 %v541, 4294901760
        %1364 = vmatprep.subr.mxu0 %v1363
        %v1365 = vand.u32 %v540, 4294901760
        %1366 = vmatpush1.msra.mxu0 %v1365
        %v1367 = vand.u32 %v539, 4294901760
        %1368 = vmatprep.subr.mxu0 %v1367
        %v1369 = vand.u32 %v538, 4294901760
        %1370 = vmatpush1.msra.mxu0 %v1369
        %v1371 = vand.u32 %v537, 4294901760
        %1372 = vmatprep.subr.mxu0 %v1371
        %v1373 = vand.u32 %v536, 4294901760
        %1374 = vmatpush1.msra.mxu0 %v1373
        %v1375 = vand.u32 %v535, 4294901760
        %1376 = vmatprep.subr.mxu0 %v1375
        %v1377 = vand.u32 %v534, 4294901760
        %1378 = vmatpush1.msra.mxu0 %v1377
        %v1379 = vand.u32 %v533, 4294901760
        %1380 = vmatprep.subr.mxu0 %v1379
        %v1381 = vand.u32 %v532, 4294901760
        %1382 = vmatpush1.msra.mxu0 %v1381
        %v1383 = vand.u32 %v531, 4294901760
        %1384 = vmatprep.subr.mxu0 %v1383
        %v1385 = vand.u32 %v530, 4294901760
        %1386 = vmatpush1.msra.mxu0 %v1385
        %v1387 = vand.u32 %v529, 4294901760
        %1388 = vmatprep.subr.mxu0 %v1387
        %v1389 = vand.u32 %v528, 4294901760
        %1390 = vmatpush1.msra.mxu0 %v1389
        %v1391 = vand.u32 %v527, 4294901760
        %1392 = vmatprep.subr.mxu0 %v1391
        %v1393 = vand.u32 %v526, 4294901760
        %1394 = vmatpush1.msra.mxu0 %v1393
        %v1395 = vand.u32 %v589, 4294901760
        %1396 = vmatprep.subr.mxu0 %v1395
        %v1397 = vand.u32 %v588, 4294901760
        %1398 = vmatpush2.msra.mxu0 %v1397
        %v1399 = vand.u32 %v587, 4294901760
        %1400 = vmatprep.subr.mxu0 %v1399
        %v1401 = vand.u32 %v586, 4294901760
        %1402 = vmatpush2.msra.mxu0 %v1401
        %v1403 = vand.u32 %v585, 4294901760
        %1404 = vmatprep.subr.mxu0 %v1403
        %v1405 = vand.u32 %v584, 4294901760
        %1406 = vmatpush2.msra.mxu0 %v1405
        %v1407 = vand.u32 %v583, 4294901760
        %1408 = vmatprep.subr.mxu0 %v1407
        %v1409 = vand.u32 %v582, 4294901760
        %1410 = vmatpush2.msra.mxu0 %v1409
        %v1411 = vand.u32 %v581, 4294901760
        %1412 = vmatprep.subr.mxu0 %v1411
        %v1413 = vand.u32 %v580, 4294901760
        %1414 = vmatpush2.msra.mxu0 %v1413
        %v1415 = vand.u32 %v579, 4294901760
        %1416 = vmatprep.subr.mxu0 %v1415
        %v1417 = vand.u32 %v578, 4294901760
        %1418 = vmatpush2.msra.mxu0 %v1417
        %v1419 = vand.u32 %v577, 4294901760
        %1420 = vmatprep.subr.mxu0 %v1419
        %v1421 = vand.u32 %v576, 4294901760
        %1422 = vmatpush2.msra.mxu0 %v1421
        %v1423 = vand.u32 %v575, 4294901760
        %1424 = vmatprep.subr.mxu0 %v1423
        %v1425 = vand.u32 %v574, 4294901760
        %1426 = vmatpush2.msra.mxu0 %v1425
        %v1427 = vand.u32 %v573, 4294901760
        %1428 = vmatprep.subr.mxu0 %v1427
        %v1429 = vand.u32 %v572, 4294901760
        %1430 = vmatpush2.msra.mxu0 %v1429
        %v1431 = vand.u32 %v571, 4294901760
        %1432 = vmatprep.subr.mxu0 %v1431
        %v1433 = vand.u32 %v570, 4294901760
        %1434 = vmatpush2.msra.mxu0 %v1433
        %v1435 = vand.u32 %v569, 4294901760
        %1436 = vmatprep.subr.mxu0 %v1435
        %v1437 = vand.u32 %v568, 4294901760
        %1438 = vmatpush2.msra.mxu0 %v1437
        %v1439 = vand.u32 %v567, 4294901760
        %1440 = vmatprep.subr.mxu0 %v1439
        %v1441 = vand.u32 %v566, 4294901760
        %1442 = vmatpush2.msra.mxu0 %v1441
        %v1443 = vand.u32 %v565, 4294901760
        %1444 = vmatprep.subr.mxu0 %v1443
        %v1445 = vand.u32 %v564, 4294901760
        %1446 = vmatpush2.msra.mxu0 %v1445
        %v1447 = vand.u32 %v563, 4294901760
        %1448 = vmatprep.subr.mxu0 %v1447
        %v1449 = vand.u32 %v562, 4294901760
        %1450 = vmatpush2.msra.mxu0 %v1449
        %v1451 = vand.u32 %v561, 4294901760
        %1452 = vmatprep.subr.mxu0 %v1451
        %v1453 = vand.u32 %v560, 4294901760
        %1454 = vmatpush2.msra.mxu0 %v1453
        %v1455 = vand.u32 %v559, 4294901760
        %1456 = vmatprep.subr.mxu0 %v1455
        %v1457 = vand.u32 %v558, 4294901760
        %1458 = vmatpush2.msra.mxu0 %v1457
        %v1459 = vand.u32 %v525, 4294901760
        %v1460 = vsub.f32 %v525, %v1459
        %v1461 = vand.u32 %v1460, 4294901760
        %1462 = vmatprep.mubr.f32.mxu0 %v1461
        %v1463 = vand.u32 %v520, 4294901760
        %v1464 = vsub.f32 %v520, %v1463
        %v1465 = vand.u32 %v1464, 4294901760
        %1466 = vmatmul.mubr.f32.gmra.mxu0 %v1465
        %v1467 = vpop.f32.mrf.mxu0
        %v1468 = vadd.f32 %v1327, %v1467
        %v1469 = vpop.f32.mrf.mxu0
        %v1470 = vadd.f32 %v1329, %v1469
        %1471 = vdwg.mxu0
        %v1472 = vand.u32 %v557, 4294901760
        %v1473 = vsub.f32 %v557, %v1472
        %v1474 = vand.u32 %v1473, 4294901760
        %1475 = vmatprep.subr.mxu0 %v1474
        %v1476 = vand.u32 %v556, 4294901760
        %v1477 = vsub.f32 %v556, %v1476
        %v1478 = vand.u32 %v1477, 4294901760
        %1479 = vmatpush1.msra.mxu0 %v1478
        %v1480 = vand.u32 %v555, 4294901760
        %v1481 = vsub.f32 %v555, %v1480
        %v1482 = vand.u32 %v1481, 4294901760
        %1483 = vmatprep.subr.mxu0 %v1482
        %v1484 = vand.u32 %v554, 4294901760
        %v1485 = vsub.f32 %v554, %v1484
        %v1486 = vand.u32 %v1485, 4294901760
        %1487 = vmatpush1.msra.mxu0 %v1486
        %v1488 = vand.u32 %v553, 4294901760
        %v1489 = vsub.f32 %v553, %v1488
        %v1490 = vand.u32 %v1489, 4294901760
        %1491 = vmatprep.subr.mxu0 %v1490
        %v1492 = vand.u32 %v552, 4294901760
        %v1493 = vsub.f32 %v552, %v1492
        %v1494 = vand.u32 %v1493, 4294901760
        %1495 = vmatpush1.msra.mxu0 %v1494
        %v1496 = vand.u32 %v551, 4294901760
        %v1497 = vsub.f32 %v551, %v1496
        %v1498 = vand.u32 %v1497, 4294901760
        %1499 = vmatprep.subr.mxu0 %v1498
        %v1500 = vand.u32 %v550, 4294901760
        %v1501 = vsub.f32 %v550, %v1500
        %v1502 = vand.u32 %v1501, 4294901760
        %1503 = vmatpush1.msra.mxu0 %v1502
        %v1504 = vand.u32 %v549, 4294901760
        %v1505 = vsub.f32 %v549, %v1504
        %v1506 = vand.u32 %v1505, 4294901760
        %1507 = vmatprep.subr.mxu0 %v1506
        %v1508 = vand.u32 %v548, 4294901760
        %v1509 = vsub.f32 %v548, %v1508
        %v1510 = vand.u32 %v1509, 4294901760
        %1511 = vmatpush1.msra.mxu0 %v1510
        %v1512 = vand.u32 %v547, 4294901760
        %v1513 = vsub.f32 %v547, %v1512
        %v1514 = vand.u32 %v1513, 4294901760
        %1515 = vmatprep.subr.mxu0 %v1514
        %v1516 = vand.u32 %v546, 4294901760
        %v1517 = vsub.f32 %v546, %v1516
        %v1518 = vand.u32 %v1517, 4294901760
        %1519 = vmatpush1.msra.mxu0 %v1518
        %v1520 = vand.u32 %v545, 4294901760
        %v1521 = vsub.f32 %v545, %v1520
        %v1522 = vand.u32 %v1521, 4294901760
        %1523 = vmatprep.subr.mxu0 %v1522
        %v1524 = vand.u32 %v544, 4294901760
        %v1525 = vsub.f32 %v544, %v1524
        %v1526 = vand.u32 %v1525, 4294901760
        %1527 = vmatpush1.msra.mxu0 %v1526
        %v1528 = vand.u32 %v543, 4294901760
        %v1529 = vsub.f32 %v543, %v1528
        %v1530 = vand.u32 %v1529, 4294901760
        %1531 = vmatprep.subr.mxu0 %v1530
        %v1532 = vand.u32 %v542, 4294901760
        %v1533 = vsub.f32 %v542, %v1532
        %v1534 = vand.u32 %v1533, 4294901760
        %1535 = vmatpush1.msra.mxu0 %v1534
        %v1536 = vand.u32 %v541, 4294901760
        %v1537 = vsub.f32 %v541, %v1536
        %v1538 = vand.u32 %v1537, 4294901760
        %1539 = vmatprep.subr.mxu0 %v1538
        %v1540 = vand.u32 %v540, 4294901760
        %v1541 = vsub.f32 %v540, %v1540
        %v1542 = vand.u32 %v1541, 4294901760
        %1543 = vmatpush1.msra.mxu0 %v1542
        %v1544 = vand.u32 %v539, 4294901760
        %v1545 = vsub.f32 %v539, %v1544
        %v1546 = vand.u32 %v1545, 4294901760
        %1547 = vmatprep.subr.mxu0 %v1546
        %v1548 = vand.u32 %v538, 4294901760
        %v1549 = vsub.f32 %v538, %v1548
        %v1550 = vand.u32 %v1549, 4294901760
        %1551 = vmatpush1.msra.mxu0 %v1550
        %v1552 = vand.u32 %v537, 4294901760
        %v1553 = vsub.f32 %v537, %v1552
        %v1554 = vand.u32 %v1553, 4294901760
        %1555 = vmatprep.subr.mxu0 %v1554
        %v1556 = vand.u32 %v536, 4294901760
        %v1557 = vsub.f32 %v536, %v1556
        %v1558 = vand.u32 %v1557, 4294901760
        %1559 = vmatpush1.msra.mxu0 %v1558
        %v1560 = vand.u32 %v535, 4294901760
        %v1561 = vsub.f32 %v535, %v1560
        %v1562 = vand.u32 %v1561, 4294901760
        %1563 = vmatprep.subr.mxu0 %v1562
        %v1564 = vand.u32 %v534, 4294901760
        %v1565 = vsub.f32 %v534, %v1564
        %v1566 = vand.u32 %v1565, 4294901760
        %1567 = vmatpush1.msra.mxu0 %v1566
        %v1568 = vand.u32 %v533, 4294901760
        %v1569 = vsub.f32 %v533, %v1568
        %v1570 = vand.u32 %v1569, 4294901760
        %1571 = vmatprep.subr.mxu0 %v1570
        %v1572 = vand.u32 %v532, 4294901760
        %v1573 = vsub.f32 %v532, %v1572
        %v1574 = vand.u32 %v1573, 4294901760
        %1575 = vmatpush1.msra.mxu0 %v1574
        %v1576 = vand.u32 %v531, 4294901760
        %v1577 = vsub.f32 %v531, %v1576
        %v1578 = vand.u32 %v1577, 4294901760
        %1579 = vmatprep.subr.mxu0 %v1578
        %v1580 = vand.u32 %v530, 4294901760
        %v1581 = vsub.f32 %v530, %v1580
        %v1582 = vand.u32 %v1581, 4294901760
        %1583 = vmatpush1.msra.mxu0 %v1582
        %v1584 = vand.u32 %v529, 4294901760
        %v1585 = vsub.f32 %v529, %v1584
        %v1586 = vand.u32 %v1585, 4294901760
        %1587 = vmatprep.subr.mxu0 %v1586
        %v1588 = vand.u32 %v528, 4294901760
        %v1589 = vsub.f32 %v528, %v1588
        %v1590 = vand.u32 %v1589, 4294901760
        %1591 = vmatpush1.msra.mxu0 %v1590
        %v1592 = vand.u32 %v527, 4294901760
        %v1593 = vsub.f32 %v527, %v1592
        %v1594 = vand.u32 %v1593, 4294901760
        %1595 = vmatprep.subr.mxu0 %v1594
        %v1596 = vand.u32 %v526, 4294901760
        %v1597 = vsub.f32 %v526, %v1596
        %v1598 = vand.u32 %v1597, 4294901760
        %1599 = vmatpush1.msra.mxu0 %v1598
        %v1600 = vand.u32 %v589, 4294901760
        %v1601 = vsub.f32 %v589, %v1600
        %v1602 = vand.u32 %v1601, 4294901760
        %1603 = vmatprep.subr.mxu0 %v1602
        %v1604 = vand.u32 %v588, 4294901760
        %v1605 = vsub.f32 %v588, %v1604
        %v1606 = vand.u32 %v1605, 4294901760
        %1607 = vmatpush2.msra.mxu0 %v1606
        %v1608 = vand.u32 %v587, 4294901760
        %v1609 = vsub.f32 %v587, %v1608
        %v1610 = vand.u32 %v1609, 4294901760
        %1611 = vmatprep.subr.mxu0 %v1610
        %v1612 = vand.u32 %v586, 4294901760
        %v1613 = vsub.f32 %v586, %v1612
        %v1614 = vand.u32 %v1613, 4294901760
        %1615 = vmatpush2.msra.mxu0 %v1614
        %v1616 = vand.u32 %v585, 4294901760
        %v1617 = vsub.f32 %v585, %v1616
        %v1618 = vand.u32 %v1617, 4294901760
        %1619 = vmatprep.subr.mxu0 %v1618
        %v1620 = vand.u32 %v584, 4294901760
        %v1621 = vsub.f32 %v584, %v1620
        %v1622 = vand.u32 %v1621, 4294901760
        %1623 = vmatpush2.msra.mxu0 %v1622
        %v1624 = vand.u32 %v583, 4294901760
        %v1625 = vsub.f32 %v583, %v1624
        %v1626 = vand.u32 %v1625, 4294901760
        %1627 = vmatprep.subr.mxu0 %v1626
        %v1628 = vand.u32 %v582, 4294901760
        %v1629 = vsub.f32 %v582, %v1628
        %v1630 = vand.u32 %v1629, 4294901760
        %1631 = vmatpush2.msra.mxu0 %v1630
        %v1632 = vand.u32 %v581, 4294901760
        %v1633 = vsub.f32 %v581, %v1632
        %v1634 = vand.u32 %v1633, 4294901760
        %1635 = vmatprep.subr.mxu0 %v1634
        %v1636 = vand.u32 %v580, 4294901760
        %v1637 = vsub.f32 %v580, %v1636
        %v1638 = vand.u32 %v1637, 4294901760
        %1639 = vmatpush2.msra.mxu0 %v1638
        %v1640 = vand.u32 %v579, 4294901760
        %v1641 = vsub.f32 %v579, %v1640
        %v1642 = vand.u32 %v1641, 4294901760
        %1643 = vmatprep.subr.mxu0 %v1642
        %v1644 = vand.u32 %v578, 4294901760
        %v1645 = vsub.f32 %v578, %v1644
        %v1646 = vand.u32 %v1645, 4294901760
        %1647 = vmatpush2.msra.mxu0 %v1646
        %v1648 = vand.u32 %v577, 4294901760
        %v1649 = vsub.f32 %v577, %v1648
        %v1650 = vand.u32 %v1649, 4294901760
        %1651 = vmatprep.subr.mxu0 %v1650
        %v1652 = vand.u32 %v576, 4294901760
        %v1653 = vsub.f32 %v576, %v1652
        %v1654 = vand.u32 %v1653, 4294901760
        %1655 = vmatpush2.msra.mxu0 %v1654
        %v1656 = vand.u32 %v575, 4294901760
        %v1657 = vsub.f32 %v575, %v1656
        %v1658 = vand.u32 %v1657, 4294901760
        %1659 = vmatprep.subr.mxu0 %v1658
        %v1660 = vand.u32 %v574, 4294901760
        %v1661 = vsub.f32 %v574, %v1660
        %v1662 = vand.u32 %v1661, 4294901760
        %1663 = vmatpush2.msra.mxu0 %v1662
        %v1664 = vand.u32 %v573, 4294901760
        %v1665 = vsub.f32 %v573, %v1664
        %v1666 = vand.u32 %v1665, 4294901760
        %1667 = vmatprep.subr.mxu0 %v1666
        %v1668 = vand.u32 %v572, 4294901760
        %v1669 = vsub.f32 %v572, %v1668
        %v1670 = vand.u32 %v1669, 4294901760
        %1671 = vmatpush2.msra.mxu0 %v1670
        %v1672 = vand.u32 %v571, 4294901760
        %v1673 = vsub.f32 %v571, %v1672
        %v1674 = vand.u32 %v1673, 4294901760
        %1675 = vmatprep.subr.mxu0 %v1674
        %v1676 = vand.u32 %v570, 4294901760
        %v1677 = vsub.f32 %v570, %v1676
        %v1678 = vand.u32 %v1677, 4294901760
        %1679 = vmatpush2.msra.mxu0 %v1678
        %v1680 = vand.u32 %v569, 4294901760
        %v1681 = vsub.f32 %v569, %v1680
        %v1682 = vand.u32 %v1681, 4294901760
        %1683 = vmatprep.subr.mxu0 %v1682
        %v1684 = vand.u32 %v568, 4294901760
        %v1685 = vsub.f32 %v568, %v1684
        %v1686 = vand.u32 %v1685, 4294901760
        %1687 = vmatpush2.msra.mxu0 %v1686
        %v1688 = vand.u32 %v567, 4294901760
        %v1689 = vsub.f32 %v567, %v1688
        %v1690 = vand.u32 %v1689, 4294901760
        %1691 = vmatprep.subr.mxu0 %v1690
        %v1692 = vand.u32 %v566, 4294901760
        %v1693 = vsub.f32 %v566, %v1692
        %v1694 = vand.u32 %v1693, 4294901760
        %1695 = vmatpush2.msra.mxu0 %v1694
        %v1696 = vand.u32 %v565, 4294901760
        %v1697 = vsub.f32 %v565, %v1696
        %v1698 = vand.u32 %v1697, 4294901760
        %1699 = vmatprep.subr.mxu0 %v1698
        %v1700 = vand.u32 %v564, 4294901760
        %v1701 = vsub.f32 %v564, %v1700
        %v1702 = vand.u32 %v1701, 4294901760
        %1703 = vmatpush2.msra.mxu0 %v1702
        %v1704 = vand.u32 %v563, 4294901760
        %v1705 = vsub.f32 %v563, %v1704
        %v1706 = vand.u32 %v1705, 4294901760
        %1707 = vmatprep.subr.mxu0 %v1706
        %v1708 = vand.u32 %v562, 4294901760
        %v1709 = vsub.f32 %v562, %v1708
        %v1710 = vand.u32 %v1709, 4294901760
        %1711 = vmatpush2.msra.mxu0 %v1710
        %v1712 = vand.u32 %v561, 4294901760
        %v1713 = vsub.f32 %v561, %v1712
        %v1714 = vand.u32 %v1713, 4294901760
        %1715 = vmatprep.subr.mxu0 %v1714
        %v1716 = vand.u32 %v560, 4294901760
        %v1717 = vsub.f32 %v560, %v1716
        %v1718 = vand.u32 %v1717, 4294901760
        %1719 = vmatpush2.msra.mxu0 %v1718
        %v1720 = vand.u32 %v559, 4294901760
        %v1721 = vsub.f32 %v559, %v1720
        %v1722 = vand.u32 %v1721, 4294901760
        %1723 = vmatprep.subr.mxu0 %v1722
        %v1724 = vand.u32 %v558, 4294901760
        %v1725 = vsub.f32 %v558, %v1724
        %v1726 = vand.u32 %v1725, 4294901760
        %1727 = vmatpush2.msra.mxu0 %v1726
        %v1728 = vand.u32 %v525, 4294901760
        %1729 = vmatprep.mubr.f32.mxu0 %v1728
        %v1730 = vand.u32 %v520, 4294901760
        %1731 = vmatmul.mubr.f32.gmra.mxu0 %v1730
        %v1732 = vpop.f32.mrf.mxu0
        %v1733 = vadd.f32 %v1468, %v1732
        %v1734 = vpop.f32.mrf.mxu0
        %v1735 = vadd.f32 %v1470, %v1734
        %1736 = vdwg.mxu0
        %v1737 = vand.u32 %v557, 4294901760
        %1738 = vmatprep.subr.mxu0 %v1737
        %v1739 = vand.u32 %v556, 4294901760
        %1740 = vmatpush1.msra.mxu0 %v1739
        %v1741 = vand.u32 %v555, 4294901760
        %1742 = vmatprep.subr.mxu0 %v1741
        %v1743 = vand.u32 %v554, 4294901760
        %1744 = vmatpush1.msra.mxu0 %v1743
        %v1745 = vand.u32 %v553, 4294901760
        %1746 = vmatprep.subr.mxu0 %v1745
        %v1747 = vand.u32 %v552, 4294901760
        %1748 = vmatpush1.msra.mxu0 %v1747
        %v1749 = vand.u32 %v551, 4294901760
        %1750 = vmatprep.subr.mxu0 %v1749
        %v1751 = vand.u32 %v550, 4294901760
        %1752 = vmatpush1.msra.mxu0 %v1751
        %v1753 = vand.u32 %v549, 4294901760
        %1754 = vmatprep.subr.mxu0 %v1753
        %v1755 = vand.u32 %v548, 4294901760
        %1756 = vmatpush1.msra.mxu0 %v1755
        %v1757 = vand.u32 %v547, 4294901760
        %1758 = vmatprep.subr.mxu0 %v1757
        %v1759 = vand.u32 %v546, 4294901760
        %1760 = vmatpush1.msra.mxu0 %v1759
        %v1761 = vand.u32 %v545, 4294901760
        %1762 = vmatprep.subr.mxu0 %v1761
        %v1763 = vand.u32 %v544, 4294901760
        %1764 = vmatpush1.msra.mxu0 %v1763
        %v1765 = vand.u32 %v543, 4294901760
        %1766 = vmatprep.subr.mxu0 %v1765
        %v1767 = vand.u32 %v542, 4294901760
        %1768 = vmatpush1.msra.mxu0 %v1767
        %v1769 = vand.u32 %v541, 4294901760
        %1770 = vmatprep.subr.mxu0 %v1769
        %v1771 = vand.u32 %v540, 4294901760
        %1772 = vmatpush1.msra.mxu0 %v1771
        %v1773 = vand.u32 %v539, 4294901760
        %1774 = vmatprep.subr.mxu0 %v1773
        %v1775 = vand.u32 %v538, 4294901760
        %1776 = vmatpush1.msra.mxu0 %v1775
        %v1777 = vand.u32 %v537, 4294901760
        %1778 = vmatprep.subr.mxu0 %v1777
        %v1779 = vand.u32 %v536, 4294901760
        %1780 = vmatpush1.msra.mxu0 %v1779
        %v1781 = vand.u32 %v535, 4294901760
        %1782 = vmatprep.subr.mxu0 %v1781
        %v1783 = vand.u32 %v534, 4294901760
        %1784 = vmatpush1.msra.mxu0 %v1783
        %v1785 = vand.u32 %v533, 4294901760
        %1786 = vmatprep.subr.mxu0 %v1785
        %v1787 = vand.u32 %v532, 4294901760
        %1788 = vmatpush1.msra.mxu0 %v1787
        %v1789 = vand.u32 %v531, 4294901760
        %1790 = vmatprep.subr.mxu0 %v1789
        %v1791 = vand.u32 %v530, 4294901760
        %1792 = vmatpush1.msra.mxu0 %v1791
        %v1793 = vand.u32 %v529, 4294901760
        %1794 = vmatprep.subr.mxu0 %v1793
        %v1795 = vand.u32 %v528, 4294901760
        %1796 = vmatpush1.msra.mxu0 %v1795
        %v1797 = vand.u32 %v527, 4294901760
        %1798 = vmatprep.subr.mxu0 %v1797
        %v1799 = vand.u32 %v526, 4294901760
        %1800 = vmatpush1.msra.mxu0 %v1799
        %v1801 = vand.u32 %v589, 4294901760
        %1802 = vmatprep.subr.mxu0 %v1801
        %v1803 = vand.u32 %v588, 4294901760
        %1804 = vmatpush2.msra.mxu0 %v1803
        %v1805 = vand.u32 %v587, 4294901760
        %1806 = vmatprep.subr.mxu0 %v1805
        %v1807 = vand.u32 %v586, 4294901760
        %1808 = vmatpush2.msra.mxu0 %v1807
        %v1809 = vand.u32 %v585, 4294901760
        %1810 = vmatprep.subr.mxu0 %v1809
        %v1811 = vand.u32 %v584, 4294901760
        %1812 = vmatpush2.msra.mxu0 %v1811
        %v1813 = vand.u32 %v583, 4294901760
        %1814 = vmatprep.subr.mxu0 %v1813
        %v1815 = vand.u32 %v582, 4294901760
        %1816 = vmatpush2.msra.mxu0 %v1815
        %v1817 = vand.u32 %v581, 4294901760
        %1818 = vmatprep.subr.mxu0 %v1817
        %v1819 = vand.u32 %v580, 4294901760
        %1820 = vmatpush2.msra.mxu0 %v1819
        %v1821 = vand.u32 %v579, 4294901760
        %1822 = vmatprep.subr.mxu0 %v1821
        %v1823 = vand.u32 %v578, 4294901760
        %1824 = vmatpush2.msra.mxu0 %v1823
        %v1825 = vand.u32 %v577, 4294901760
        %1826 = vmatprep.subr.mxu0 %v1825
        %v1827 = vand.u32 %v576, 4294901760
        %1828 = vmatpush2.msra.mxu0 %v1827
        %v1829 = vand.u32 %v575, 4294901760
        %1830 = vmatprep.subr.mxu0 %v1829
        %v1831 = vand.u32 %v574, 4294901760
        %1832 = vmatpush2.msra.mxu0 %v1831
        %v1833 = vand.u32 %v573, 4294901760
        %1834 = vmatprep.subr.mxu0 %v1833
        %v1835 = vand.u32 %v572, 4294901760
        %1836 = vmatpush2.msra.mxu0 %v1835
        %v1837 = vand.u32 %v571, 4294901760
        %1838 = vmatprep.subr.mxu0 %v1837
        %v1839 = vand.u32 %v570, 4294901760
        %1840 = vmatpush2.msra.mxu0 %v1839
        %v1841 = vand.u32 %v569, 4294901760
        %1842 = vmatprep.subr.mxu0 %v1841
        %v1843 = vand.u32 %v568, 4294901760
        %1844 = vmatpush2.msra.mxu0 %v1843
        %v1845 = vand.u32 %v567, 4294901760
        %1846 = vmatprep.subr.mxu0 %v1845
        %v1847 = vand.u32 %v566, 4294901760
        %1848 = vmatpush2.msra.mxu0 %v1847
        %v1849 = vand.u32 %v565, 4294901760
        %1850 = vmatprep.subr.mxu0 %v1849
        %v1851 = vand.u32 %v564, 4294901760
        %1852 = vmatpush2.msra.mxu0 %v1851
        %v1853 = vand.u32 %v563, 4294901760
        %1854 = vmatprep.subr.mxu0 %v1853
        %v1855 = vand.u32 %v562, 4294901760
        %1856 = vmatpush2.msra.mxu0 %v1855
        %v1857 = vand.u32 %v561, 4294901760
        %1858 = vmatprep.subr.mxu0 %v1857
        %v1859 = vand.u32 %v560, 4294901760
        %1860 = vmatpush2.msra.mxu0 %v1859
        %v1861 = vand.u32 %v559, 4294901760
        %1862 = vmatprep.subr.mxu0 %v1861
        %v1863 = vand.u32 %v558, 4294901760
        %1864 = vmatpush2.msra.mxu0 %v1863
        %v1865 = vand.u32 %v525, 4294901760
        %1866 = vmatprep.mubr.f32.mxu0 %v1865
        %v1867 = vand.u32 %v520, 4294901760
        %1868 = vmatmul.mubr.f32.gmra.mxu0 %v1867
        %v1869 = vpop.f32.mrf.mxu0
        %v1870 = vadd.f32 %v1733, %v1869
        %v1871 = vpop.f32.mrf.mxu0
        %v1872 = vadd.f32 %v1735, %v1871
        %1873 = vdwg.mxu0
        %v1876 = vcombine.low %v1870, %v1872
        %v1878 = vunpack.c.l.s4 1983009808
        %v1879 = vunpack.c.0.s8 %v1878
        %v1880 = vlaneseq
        %v1881 = vshrl.u32 %v1880, 7
        %v1882 = vsub.s32 %v1879, %v1881
        %v1883 = vrot.slane %v1876, %v1882
        %1885 = vst [vmem:[%s270] sm:$0xf] %v1883
        %s1886 = sand.u32 %s137, 1
        %s1887 = scalar_lea.sflag [#allocation4], %s1886
        %s1888 = sand.u32 %s137, 1
        %s1889 = smul.addr %s1888, 4
        %s1890 = scalar_lea.vmem [#allocation13], %s1889
        // Predicated region
        $region61: #{tpu_custom_call.1} parent=39 // pred_check
          %p1891 = pneg %p147
        $region62: #{tpu_custom_call.1} parent=39 // pred_check_branch
          %1893 = sbr.rel (%p1891) target = $region64
        $region63: #{tpu_custom_call.1} parent=39 // pred_region
          %s1895 = ssub.s32 64, 64
          %1896 = vsyncadd %s1887, %s1895
          %s1897 = smul.addr %s24, 2
          %s1898 = smul.addr %s1897, 32
          %s1899 = scalar_lea.hbm %s5, %s1898
          %s1901 = sshll.u32 %s1890, 4
          %s1902 = int_to_ptr.vmem [resolvable:$true] %s1901
          %1904 = dma.vmem_to_hbm [thread:$0]  %s1902, 64, %s1899, %s1887
        $region64: #{tpu_custom_call.1} parent=39 // pred_fallthru
          _
      $region40: #{tpu_custom_call.1} parent=5 // pred_fallthru
        _
      %p1905 = scmp.le.s32.totalorder 2, %s19
      // Predicated region
      $region65: #{tpu_custom_call.1} parent=5 // pred_check
        %p1906 = pneg %p1905
      $region66: #{tpu_custom_call.1} parent=5 // pred_check_branch
        %1908 = sbr.rel (%p1906) target = $region68
      $region67: #{tpu_custom_call.1} parent=5 // pred_region
        %s1909 = ssub.s32 %s19, 2
        // Predicated region
        $region69: #{tpu_custom_call.1} parent=67 // pred_check
          %p1910 = pneg %p153
        $region70: #{tpu_custom_call.1} parent=67 // pred_check_branch
          %1912 = sbr.rel (%p1910) target = $region72
        $region71: #{tpu_custom_call.1} parent=67 // pred_region
          %s1913 = sand.u32 %s138, 1
          %s1914 = scalar_lea.sflag [#allocation4], %s1913
          %s1915 = sand.u32 %s138, 1
          %s1916 = smul.addr %s1915, 4
          %s1917 = scalar_lea.vmem [#allocation13], %s1916
          %1918 = dma.done %s1914, 64
        $region72: #{tpu_custom_call.1} parent=67 // pred_fallthru
          _
      $region68: #{tpu_custom_call.1} parent=5 // pred_fallthru
        _
    $region6: #{tpu_custom_call.1} parent=1 // loop_footer
      %s23 = sadd.s32 1, %s19
    $region7: #{tpu_custom_call.1} parent=1 // loop_footer_branch
      %18 = sbr.rel target = $region3
    $region8: #{tpu_custom_call.1} parent=1 // loop_exit
      _
    %1919 = vsyncpa [#allocation3], 1
    %s1920 = scalar_lea.sflag [#allocation3], 1
    %1921 = vsyncpa %s1920, 1
    %1922 = vsyncpa [#allocation12], 1
    %1923 = vsyncpa [#allocation4], 1
    %s1924 = scalar_lea.sflag [#allocation4], 1
    %1925 = vsyncpa %s1924, 1
    %1926 = vsyncpa [#allocation5], 1
    %s1927 = scalar_lea.sflag [#allocation5], 1
    %1928 = vsyncpa %s1927, 1
    %1929 = vsyncpa [#allocation6], 1
    %s1930 = scalar_lea.sflag [#allocation6], 1
    %1931 = vsyncpa %s1930, 1
    %1932 = vsyncpa [#allocation9], 1

</llo_original>
